<compile_context>
chip_gen: v6e
topology: v6e:2x2x1
jax: 0.10.0
libtpu: 0.0.40
codegen_flags: <defaults>
</compile_context>

<pallas_src>
import math
import numpy as np
import jax
import jax.numpy as jnp
from jax.experimental import pallas as pl
from jax.experimental.pallas import tpu as pltpu  # noqa: F401  (kept for TPU-specific tuning hooks)

# ----------------------- small, decoder-consistent config -----------------------
B = 2            # batch
S = 8            # sequence length
HID = 32         # hidden size
NQ = 4           # query heads
NKV = 2          # key/value heads
D = HID // NQ    # head dim = 8
G = NQ // NKV    # kv groups = 2
INTER = 64       # MLP intermediate size
EPS = 1e-6
N = B * S        # 16 rows

QW = NQ * D      # 32 query-proj columns
KW = NKV * D     # 16 key/value-proj columns
LANES = 128
NEG = -1e30


# ----------------------------- fused Pallas kernel -------------------------------
def decoder_kernel(x_ref, wqkv_ref, wo_ref, wgu_ref, wd_ref, aux_ref, o_ref):
    """Entire decoder layer on a (N, HID) slab held in VMEM (no grid)."""
    x = x_ref[...]                                        # (N, HID)
    aux = aux_ref[...]                                    # (N, 128) packed tables

    # ---- input RMSNorm (ln1 weight folded into wqkv rows at prep time) ----
    var = jnp.mean(x * x, axis=-1, keepdims=True)
    xn = x * jax.lax.rsqrt(var + EPS)

    # ---- fused Q/K/V (+ rotate-half-folded) projection: one 128-lane MXU push ----
    qkv = jnp.dot(xn, wqkv_ref[...], preferred_element_type=jnp.float32)   # (N, 128)
    q     = qkv[:, 0:QW]                                   # (N, 32)
    k     = qkv[:, QW:QW + KW]                             # (N, 16)
    v     = qkv[:, QW + KW:QW + 2 * KW]                    # (N, 16)
    q_rot = qkv[:, QW + 2 * KW:2 * QW + 2 * KW]            # (N, 32)  = rotate_half(q)
    k_rot = qkv[:, 2 * QW + 2 * KW:2 * QW + 3 * KW]        # (N, 16)  = rotate_half(k)

    # ---- packed aux: pre-tiled cos/sin (scale folded into cosq/sinq) + attn bias ----
    cosq = aux[:, 0:QW]
    sinq = aux[:, QW:2 * QW]
    cosk = aux[:, 2 * QW:2 * QW + KW]
    sink = aux[:, 2 * QW + KW:2 * QW + 2 * KW]
    bias = aux[:, 2 * QW + 2 * KW:2 * QW + 2 * KW + N]     # (N, N) 0 / -1e30

    # ---- RoPE: rotate_half already folded into weights; 1/sqrt(D) folded into cosq/sinq
    q = q * cosq + q_rot * sinq
    k = k * cosk + k_rot * sink

    # ---- causal GQA attention over all batches at once (block-diag+causal bias) ----
    o_parts = []
    for h in range(NQ):
        kv = h // G
        q_h = q[:, h * D:(h + 1) * D]                      # (N, D)
        k_h = k[:, kv * D:(kv + 1) * D]                    # (N, D)
        v_h = v[:, kv * D:(kv + 1) * D]                    # (N, D)
        s_ = jax.lax.dot_general(q_h, k_h, (((1,), (1,)), ((), ())),
                                 preferred_element_type=jnp.float32) + bias
        m = jnp.max(s_, axis=-1, keepdims=True)
        e = jnp.exp(s_ - m)
        p = e / jnp.sum(e, axis=-1, keepdims=True)         # exact softmax division
        o_parts.append(jnp.dot(p, v_h, preferred_element_type=jnp.float32))
    attn = jnp.concatenate(o_parts, axis=-1)               # (N, QW), stays in VMEM

    # ---- o_proj + residual ----
    h1 = x + jnp.dot(attn, wo_ref[...], preferred_element_type=jnp.float32)

    # ---- post-attention RMSNorm (ln2 folded into wgu rows) + fused SwiGLU MLP ----
    var2 = jnp.mean(h1 * h1, axis=-1, keepdims=True)
    hn = h1 * jax.lax.rsqrt(var2 + EPS)
    gu = jnp.dot(hn, wgu_ref[...], preferred_element_type=jnp.float32)     # (N, 128)
    g = gu[:, :INTER]
    u = gu[:, INTER:]
    mlp = jnp.dot(g * jax.nn.sigmoid(g) * u, wd_ref[...],
                  preferred_element_type=jnp.float32)
    o_ref[...] = h1 + mlp                                  # direct (N, HID) store


# ----------------------------- parameter / table setup --------------------------
def make_params():
    key = jax.random.PRNGKey(0)
    ks = jax.random.split(key, 9)

    def w(k, shape, scale=0.05):
        return jax.random.normal(k, shape, dtype=jnp.float32) * scale

    p = {}
    p["Wq"] = w(ks[0], (HID, QW))
    p["Wk"] = w(ks[1], (HID, KW))
    p["Wv"] = w(ks[2], (HID, KW))
    p["Wo"] = w(ks[3], (QW, HID))
    p["Wg"] = w(ks[4], (HID, INTER))
    p["Wu"] = w(ks[5], (HID, INTER))
    p["Wd"] = w(ks[6], (INTER, HID))
    p["ln1"] = 1.0 + 0.1 * jax.random.normal(ks[7], (HID,), dtype=jnp.float32)
    p["ln2"] = 1.0 + 0.1 * jax.random.normal(ks[8], (HID,), dtype=jnp.float32)

    # RoPE tables matching the PyTorch buffers:
    # pids = arange(4096) + 8192; slice offset = 4096 - S -> positions 12288-S .. 12287
    inv_freq = 1.0 / (10000.0 ** (np.arange(0, D, 2, dtype=np.float32) / D))
    freq = np.concatenate([inv_freq, inv_freq]).astype(np.float32)      # (D,)
    pos = (12288 - S) + np.arange(S, dtype=np.float32)                  # (S,)
    ang = pos[:, None] * freq[None, :]                                  # (S, D)
    p["cos"] = jnp.asarray(np.cos(ang), dtype=jnp.float32)
    p["sin"] = jnp.asarray(np.sin(ang), dtype=jnp.float32)
    return p


def _rot_half_matrix():
    """(D, D) signed permutation R such that t @ R == rotate_half(t)."""
    R = np.zeros((D, D), dtype=np.float32)
    half = D // 2
    for j in range(half):
        R[half + j, j] = -1.0          # out[j]        = -t[half + j]
        R[j, half + j] = 1.0           # out[half + j] =  t[j]
    return R


def pack_for_kernel(p):
    """Host-side one-time weight fusion / table packing (perf items 1-5,7)."""
    R = _rot_half_matrix()
    Rq = np.kron(np.eye(NQ, dtype=np.float32), R)      # block-diag per q head
    Rk = np.kron(np.eye(NKV, dtype=np.float32), R)     # block-diag per kv head

    ln1 = np.asarray(p["ln1"])[:, None]
    ln2 = np.asarray(p["ln2"])[:, None]

    # Fold ln1 into QKV rows; append rotate-half-folded columns; pad to 128 lanes.
    Wq = ln1 * np.asarray(p["Wq"])
    Wk = ln1 * np.asarray(p["Wk"])
    Wv = ln1 * np.asarray(p["Wv"])
    pad_qkv = LANES - (2 * QW + 3 * KW)                 # 128 - 112 = 16
    w_qkv = np.concatenate(
        [Wq, Wk, Wv, Wq @ Rq, Wk @ Rk, np.zeros((HID, pad_qkv), np.float32)], axis=1)

    # Fold ln2 into fused gate/up weight (exactly 128 columns).
    w_gu = np.concatenate([ln2 * np.asarray(p["Wg"]), ln2 * np.asarray(p["Wu"])], axis=1)

    # Packed aux table: pre-tiled cos/sin (1/sqrt(D) folded into q tables) + attn bias.
    cos = np.asarray(p["cos"])
    sin = np.asarray(p["sin"])
    scale = 1.0 / math.sqrt(D)
    cosq = np.tile(cos, (B, NQ)) * scale                # (N, 32)
    sinq = np.tile(sin, (B, NQ)) * scale                # (N, 32)
    cosk = np.tile(cos, (B, NKV))                       # (N, 16)
    sink = np.tile(sin, (B, NKV))                       # (N, 16)
    r = np.arange(N)
    allowed = (r[:, None] // S == r[None, :] // S) & (r[None, :] <= r[:, None])
    bias = np.where(allowed, 0.0, NEG).astype(np.float32)   # (N, N)
    pad_aux = LANES - (2 * QW + 2 * KW + N)             # 128 - 112 = 16
    aux = np.concatenate(
        [cosq, sinq, cosk, sink, bias, np.zeros((N, pad_aux), np.float32)], axis=1)

    return {
        "w_qkv": jnp.asarray(w_qkv, dtype=jnp.float32),   # (32, 128)
        "w_o":   p["Wo"],                                  # (32, 32)
        "w_gu":  jnp.asarray(w_gu, dtype=jnp.float32),     # (32, 128)
        "w_d":   p["Wd"],                                  # (64, 32)
        "aux":   jnp.asarray(aux, dtype=jnp.float32),      # (16, 128)
    }


# ----------------------------- Pallas-backed decoder -----------------------------
@jax.jit
def jdecoder_pallas(x, packed):
    xf = x.reshape(N, HID).astype(jnp.float32)
    out = pl.pallas_call(
        decoder_kernel,
        out_shape=jax.ShapeDtypeStruct((N, HID), jnp.float32),
    )(xf, packed["w_qkv"], packed["w_o"], packed["w_gu"], packed["w_d"], packed["aux"])
    return out.reshape(B, S, HID)


# ----------------------------- pure-JAX reference --------------------------------
def jdecoder_ref(x, p):
    def rmsnorm(h, w_):
        var = jnp.mean(h * h, axis=-1, keepdims=True)
        return h * jax.lax.rsqrt(var + EPS) * w_

    def rot_half(t):
        t1 = t[..., : D // 2]
        t2 = t[..., D // 2:]
        return jnp.concatenate([-t2, t1], axis=-1)

    xn = rmsnorm(x, p["ln1"])
    q = (xn @ p["Wq"]).reshape(B, S, NQ, D)
    k = (xn @ p["Wk"]).reshape(B, S, NKV, D)
    v = (xn @ p["Wv"]).reshape(B, S, NKV, D)

    cos = p["cos"][None, :, None, :]
    sin = p["sin"][None, :, None, :]
    q = q * cos + rot_half(q) * sin
    k = k * cos + rot_half(k) * sin

    q = q.transpose(0, 2, 1, 3)
    k = jnp.repeat(k.transpose(0, 2, 1, 3), G, axis=1)
    v = jnp.repeat(v.transpose(0, 2, 1, 3), G, axis=1)

    s = jnp.einsum("bhqd,bhkd->bhqk", q, k) / math.sqrt(D)
    mask = jnp.tril(jnp.ones((S, S), dtype=jnp.float32))
    s = jnp.where(mask == 0, jnp.float32(NEG), s)
    w_ = jax.nn.softmax(s, axis=-1)
    o = jnp.einsum("bhqk,bhkd->bhqd", w_, v)
    o = o.transpose(0, 2, 1, 3).reshape(B, S, NQ * D)

    h1 = x + o @ p["Wo"]
    hn = rmsnorm(h1, p["ln2"])
    g = hn @ p["Wg"]
    u = hn @ p["Wu"]
    return (jax.nn.silu(g) * u) @ p["Wd"] + h1


# --------------------------------- main ------------------------------------------
if __name__ == "__main__":
    params = make_params()
    packed = pack_for_kernel(params)
    x = jax.random.normal(jax.random.PRNGKey(0), (B, S, HID), dtype=jnp.float32)

    out = jax.block_until_ready(jdecoder_pallas(x, packed))
    ref = jax.block_until_ready(jdecoder_ref(x, params))
    np.testing.assert_allclose(np.asarray(out), np.asarray(ref),
                               rtol=1e-4, atol=1e-4)
    print("KERNEL_OK")
</pallas_src>

<mosaic_0001>
module attributes {stable_mosaic.version = 11 : i64} {
  func.func @decoder_kernel(%arg0: memref<16x32xf32, #tpu.memory_space<vmem>>, %arg1: memref<32x128xf32, #tpu.memory_space<vmem>>, %arg2: memref<32x32xf32, #tpu.memory_space<vmem>>, %arg3: memref<32x128xf32, #tpu.memory_space<vmem>>, %arg4: memref<64x32xf32, #tpu.memory_space<vmem>>, %arg5: memref<16x128xf32, #tpu.memory_space<vmem>>, %arg6: memref<16x32xf32, #tpu.memory_space<vmem>>) attributes {dimension_semantics = [], scalar_prefetch = 0 : i64, scratch_operands = 0 : i64, tpu.core_type = #tpu.core_type<tc>} {
    %c0 = arith.constant 0 : index
    %c0_0 = arith.constant 0 : index
    %0 = vector.load %arg0[%c0, %c0_0] : memref<16x32xf32, #tpu.memory_space<vmem>>, vector<16x32xf32>
    %c0_1 = arith.constant 0 : index
    %c0_2 = arith.constant 0 : index
    %1 = vector.load %arg5[%c0_1, %c0_2] : memref<16x128xf32, #tpu.memory_space<vmem>>, vector<16x128xf32>
    %2 = arith.mulf %0, %0 : vector<16x32xf32>
    %cst = arith.constant dense<0.000000e+00> : vector<16xf32>
    %3 = vector.multi_reduction <add>, %2, %cst [1] : vector<16x32xf32> to vector<16xf32>
    %4 = vector.shape_cast %3 : vector<16xf32> to vector<16x1xf32>
    %cst_3 = arith.constant 3.200000e+01 : f32
    %5 = vector.broadcast %cst_3 : f32 to vector<16x1xf32>
    %6 = arith.divf %4, %5 : vector<16x1xf32>
    %cst_4 = arith.constant 9.99999997E-7 : f32
    %7 = vector.broadcast %cst_4 : f32 to vector<16x1xf32>
    %8 = arith.addf %6, %7 : vector<16x1xf32>
    %9 = math.rsqrt %8 : vector<16x1xf32>
    %10 = vector.broadcast %9 : vector<16x1xf32> to vector<16x32xf32>
    %11 = arith.mulf %0, %10 : vector<16x32xf32>
    %c0_5 = arith.constant 0 : index
    %c0_6 = arith.constant 0 : index
    %12 = vector.load %arg1[%c0_5, %c0_6] : memref<32x128xf32, #tpu.memory_space<vmem>>, vector<32x128xf32>
    %cst_7 = arith.constant dense<0.000000e+00> : vector<16x128xf32>
    %13 = tpu.matmul %11, %12, %cst_7 {dimension_numbers = #tpu.dot_dimension_numbers<[1], [0], [0], [1], [0, 0, 1, 1], [], []>} : vector<16x32xf32>, vector<32x128xf32>, vector<16x128xf32> -> vector<16x128xf32>
    %14 = vector.extract_strided_slice %13 {offsets = [0, 0], sizes = [16, 32], strides = [1, 1]} : vector<16x128xf32> to vector<16x32xf32>
    %15 = vector.extract_strided_slice %13 {offsets = [0, 32], sizes = [16, 16], strides = [1, 1]} : vector<16x128xf32> to vector<16x16xf32>
    %16 = vector.extract_strided_slice %13 {offsets = [0, 48], sizes = [16, 16], strides = [1, 1]} : vector<16x128xf32> to vector<16x16xf32>
    %17 = vector.extract_strided_slice %13 {offsets = [0, 64], sizes = [16, 32], strides = [1, 1]} : vector<16x128xf32> to vector<16x32xf32>
    %18 = vector.extract_strided_slice %13 {offsets = [0, 96], sizes = [16, 16], strides = [1, 1]} : vector<16x128xf32> to vector<16x16xf32>
    %19 = vector.extract_strided_slice %1 {offsets = [0, 0], sizes = [16, 32], strides = [1, 1]} : vector<16x128xf32> to vector<16x32xf32>
    %20 = vector.extract_strided_slice %1 {offsets = [0, 32], sizes = [16, 32], strides = [1, 1]} : vector<16x128xf32> to vector<16x32xf32>
    %21 = vector.extract_strided_slice %1 {offsets = [0, 64], sizes = [16, 16], strides = [1, 1]} : vector<16x128xf32> to vector<16x16xf32>
    %22 = vector.extract_strided_slice %1 {offsets = [0, 80], sizes = [16, 16], strides = [1, 1]} : vector<16x128xf32> to vector<16x16xf32>
    %23 = vector.extract_strided_slice %1 {offsets = [0, 96], sizes = [16, 16], strides = [1, 1]} : vector<16x128xf32> to vector<16x16xf32>
    %24 = arith.mulf %14, %19 : vector<16x32xf32>
    %25 = arith.mulf %17, %20 : vector<16x32xf32>
    %26 = arith.addf %24, %25 : vector<16x32xf32>
    %27 = arith.mulf %15, %21 : vector<16x16xf32>
    %28 = arith.mulf %18, %22 : vector<16x16xf32>
    %29 = arith.addf %27, %28 : vector<16x16xf32>
    %30 = vector.extract_strided_slice %26 {offsets = [0, 0], sizes = [16, 8], strides = [1, 1]} : vector<16x32xf32> to vector<16x8xf32>
    %31 = vector.extract_strided_slice %29 {offsets = [0, 0], sizes = [16, 8], strides = [1, 1]} : vector<16x16xf32> to vector<16x8xf32>
    %32 = vector.extract_strided_slice %16 {offsets = [0, 0], sizes = [16, 8], strides = [1, 1]} : vector<16x16xf32> to vector<16x8xf32>
    %cst_8 = arith.constant dense<0.000000e+00> : vector<16x16xf32>
    %33 = tpu.matmul %30, %31, %cst_8 {dimension_numbers = #tpu.dot_dimension_numbers<[1], [1], [0], [0], [0, 0, 1, 0], [], []>} : vector<16x8xf32>, vector<16x8xf32>, vector<16x16xf32> -> vector<16x16xf32>
    %34 = arith.addf %33, %23 : vector<16x16xf32>
    %cst_9 = arith.constant dense<0xFF800000> : vector<16xf32>
    %35 = vector.multi_reduction <maximumf>, %34, %cst_9 [1] : vector<16x16xf32> to vector<16xf32>
    %36 = vector.shape_cast %35 : vector<16xf32> to vector<16x1xf32>
    %37 = vector.broadcast %36 : vector<16x1xf32> to vector<16x16xf32>
    %38 = arith.subf %34, %37 : vector<16x16xf32>
    %39 = math.exp %38 : vector<16x16xf32>
    %cst_10 = arith.constant dense<0.000000e+00> : vector<16xf32>
    %40 = vector.multi_reduction <add>, %39, %cst_10 [1] : vector<16x16xf32> to vector<16xf32>
    %41 = vector.shape_cast %40 : vector<16xf32> to vector<16x1xf32>
    %42 = vector.broadcast %41 : vector<16x1xf32> to vector<16x16xf32>
    %43 = arith.divf %39, %42 : vector<16x16xf32>
    %cst_11 = arith.constant dense<0.000000e+00> : vector<16x8xf32>
    %44 = tpu.matmul %43, %32, %cst_11 {dimension_numbers = #tpu.dot_dimension_numbers<[1], [0], [0], [1], [0, 0, 1, 1], [], []>} : vector<16x16xf32>, vector<16x8xf32>, vector<16x8xf32> -> vector<16x8xf32>
    %45 = vector.extract_strided_slice %26 {offsets = [0, 8], sizes = [16, 8], strides = [1, 1]} : vector<16x32xf32> to vector<16x8xf32>
    %46 = vector.extract_strided_slice %29 {offsets = [0, 0], sizes = [16, 8], strides = [1, 1]} : vector<16x16xf32> to vector<16x8xf32>
    %47 = vector.extract_strided_slice %16 {offsets = [0, 0], sizes = [16, 8], strides = [1, 1]} : vector<16x16xf32> to vector<16x8xf32>
    %cst_12 = arith.constant dense<0.000000e+00> : vector<16x16xf32>
    %48 = tpu.matmul %45, %46, %cst_12 {dimension_numbers = #tpu.dot_dimension_numbers<[1], [1], [0], [0], [0, 0, 1, 0], [], []>} : vector<16x8xf32>, vector<16x8xf32>, vector<16x16xf32> -> vector<16x16xf32>
    %49 = arith.addf %48, %23 : vector<16x16xf32>
    %cst_13 = arith.constant dense<0xFF800000> : vector<16xf32>
    %50 = vector.multi_reduction <maximumf>, %49, %cst_13 [1] : vector<16x16xf32> to vector<16xf32>
    %51 = vector.shape_cast %50 : vector<16xf32> to vector<16x1xf32>
    %52 = vector.broadcast %51 : vector<16x1xf32> to vector<16x16xf32>
    %53 = arith.subf %49, %52 : vector<16x16xf32>
    %54 = math.exp %53 : vector<16x16xf32>
    %cst_14 = arith.constant dense<0.000000e+00> : vector<16xf32>
    %55 = vector.multi_reduction <add>, %54, %cst_14 [1] : vector<16x16xf32> to vector<16xf32>
    %56 = vector.shape_cast %55 : vector<16xf32> to vector<16x1xf32>
    %57 = vector.broadcast %56 : vector<16x1xf32> to vector<16x16xf32>
    %58 = arith.divf %54, %57 : vector<16x16xf32>
    %cst_15 = arith.constant dense<0.000000e+00> : vector<16x8xf32>
    %59 = tpu.matmul %58, %47, %cst_15 {dimension_numbers = #tpu.dot_dimension_numbers<[1], [0], [0], [1], [0, 0, 1, 1], [], []>} : vector<16x16xf32>, vector<16x8xf32>, vector<16x8xf32> -> vector<16x8xf32>
    %60 = vector.extract_strided_slice %26 {offsets = [0, 16], sizes = [16, 8], strides = [1, 1]} : vector<16x32xf32> to vector<16x8xf32>
    %61 = vector.extract_strided_slice %29 {offsets = [0, 8], sizes = [16, 8], strides = [1, 1]} : vector<16x16xf32> to vector<16x8xf32>
    %62 = vector.extract_strided_slice %16 {offsets = [0, 8], sizes = [16, 8], strides = [1, 1]} : vector<16x16xf32> to vector<16x8xf32>
    %cst_16 = arith.constant dense<0.000000e+00> : vector<16x16xf32>
    %63 = tpu.matmul %60, %61, %cst_16 {dimension_numbers = #tpu.dot_dimension_numbers<[1], [1], [0], [0], [0, 0, 1, 0], [], []>} : vector<16x8xf32>, vector<16x8xf32>, vector<16x16xf32> -> vector<16x16xf32>
    %64 = arith.addf %63, %23 : vector<16x16xf32>
    %cst_17 = arith.constant dense<0xFF800000> : vector<16xf32>
    %65 = vector.multi_reduction <maximumf>, %64, %cst_17 [1] : vector<16x16xf32> to vector<16xf32>
    %66 = vector.shape_cast %65 : vector<16xf32> to vector<16x1xf32>
    %67 = vector.broadcast %66 : vector<16x1xf32> to vector<16x16xf32>
    %68 = arith.subf %64, %67 : vector<16x16xf32>
    %69 = math.exp %68 : vector<16x16xf32>
    %cst_18 = arith.constant dense<0.000000e+00> : vector<16xf32>
    %70 = vector.multi_reduction <add>, %69, %cst_18 [1] : vector<16x16xf32> to vector<16xf32>
    %71 = vector.shape_cast %70 : vector<16xf32> to vector<16x1xf32>
    %72 = vector.broadcast %71 : vector<16x1xf32> to vector<16x16xf32>
    %73 = arith.divf %69, %72 : vector<16x16xf32>
    %cst_19 = arith.constant dense<0.000000e+00> : vector<16x8xf32>
    %74 = tpu.matmul %73, %62, %cst_19 {dimension_numbers = #tpu.dot_dimension_numbers<[1], [0], [0], [1], [0, 0, 1, 1], [], []>} : vector<16x16xf32>, vector<16x8xf32>, vector<16x8xf32> -> vector<16x8xf32>
    %75 = vector.extract_strided_slice %26 {offsets = [0, 24], sizes = [16, 8], strides = [1, 1]} : vector<16x32xf32> to vector<16x8xf32>
    %76 = vector.extract_strided_slice %29 {offsets = [0, 8], sizes = [16, 8], strides = [1, 1]} : vector<16x16xf32> to vector<16x8xf32>
    %77 = vector.extract_strided_slice %16 {offsets = [0, 8], sizes = [16, 8], strides = [1, 1]} : vector<16x16xf32> to vector<16x8xf32>
    %cst_20 = arith.constant dense<0.000000e+00> : vector<16x16xf32>
    %78 = tpu.matmul %75, %76, %cst_20 {dimension_numbers = #tpu.dot_dimension_numbers<[1], [1], [0], [0], [0, 0, 1, 0], [], []>} : vector<16x8xf32>, vector<16x8xf32>, vector<16x16xf32> -> vector<16x16xf32>
    %79 = arith.addf %78, %23 : vector<16x16xf32>
    %cst_21 = arith.constant dense<0xFF800000> : vector<16xf32>
    %80 = vector.multi_reduction <maximumf>, %79, %cst_21 [1] : vector<16x16xf32> to vector<16xf32>
    %81 = vector.shape_cast %80 : vector<16xf32> to vector<16x1xf32>
    %82 = vector.broadcast %81 : vector<16x1xf32> to vector<16x16xf32>
    %83 = arith.subf %79, %82 : vector<16x16xf32>
    %84 = math.exp %83 : vector<16x16xf32>
    %cst_22 = arith.constant dense<0.000000e+00> : vector<16xf32>
    %85 = vector.multi_reduction <add>, %84, %cst_22 [1] : vector<16x16xf32> to vector<16xf32>
    %86 = vector.shape_cast %85 : vector<16xf32> to vector<16x1xf32>
    %87 = vector.broadcast %86 : vector<16x1xf32> to vector<16x16xf32>
    %88 = arith.divf %84, %87 : vector<16x16xf32>
    %cst_23 = arith.constant dense<0.000000e+00> : vector<16x8xf32>
    %89 = tpu.matmul %88, %77, %cst_23 {dimension_numbers = #tpu.dot_dimension_numbers<[1], [0], [0], [1], [0, 0, 1, 1], [], []>} : vector<16x16xf32>, vector<16x8xf32>, vector<16x8xf32> -> vector<16x8xf32>
    %90 = tpu.concatenate %44, %59, %74, %89 in 1 : vector<16x8xf32>, vector<16x8xf32>, vector<16x8xf32>, vector<16x8xf32> -> vector<16x32xf32>
    %c0_24 = arith.constant 0 : index
    %c0_25 = arith.constant 0 : index
    %91 = vector.load %arg2[%c0_24, %c0_25] : memref<32x32xf32, #tpu.memory_space<vmem>>, vector<32x32xf32>
    %cst_26 = arith.constant dense<0.000000e+00> : vector<16x32xf32>
    %92 = tpu.matmul %90, %91, %cst_26 {dimension_numbers = #tpu.dot_dimension_numbers<[1], [0], [0], [1], [0, 0, 1, 1], [], []>} : vector<16x32xf32>, vector<32x32xf32>, vector<16x32xf32> -> vector<16x32xf32>
    %93 = arith.addf %0, %92 : vector<16x32xf32>
    %94 = arith.mulf %93, %93 : vector<16x32xf32>
    %cst_27 = arith.constant dense<0.000000e+00> : vector<16xf32>
    %95 = vector.multi_reduction <add>, %94, %cst_27 [1] : vector<16x32xf32> to vector<16xf32>
    %96 = vector.shape_cast %95 : vector<16xf32> to vector<16x1xf32>
    %cst_28 = arith.constant 3.200000e+01 : f32
    %97 = vector.broadcast %cst_28 : f32 to vector<16x1xf32>
    %98 = arith.divf %96, %97 : vector<16x1xf32>
    %cst_29 = arith.constant 9.99999997E-7 : f32
    %99 = vector.broadcast %cst_29 : f32 to vector<16x1xf32>
    %100 = arith.addf %98, %99 : vector<16x1xf32>
    %101 = math.rsqrt %100 : vector<16x1xf32>
    %102 = vector.broadcast %101 : vector<16x1xf32> to vector<16x32xf32>
    %103 = arith.mulf %93, %102 : vector<16x32xf32>
    %c0_30 = arith.constant 0 : index
    %c0_31 = arith.constant 0 : index
    %104 = vector.load %arg3[%c0_30, %c0_31] : memref<32x128xf32, #tpu.memory_space<vmem>>, vector<32x128xf32>
    %cst_32 = arith.constant dense<0.000000e+00> : vector<16x128xf32>
    %105 = tpu.matmul %103, %104, %cst_32 {dimension_numbers = #tpu.dot_dimension_numbers<[1], [0], [0], [1], [0, 0, 1, 1], [], []>} : vector<16x32xf32>, vector<32x128xf32>, vector<16x128xf32> -> vector<16x128xf32>
    %106 = vector.extract_strided_slice %105 {offsets = [0, 0], sizes = [16, 64], strides = [1, 1]} : vector<16x128xf32> to vector<16x64xf32>
    %107 = vector.extract_strided_slice %105 {offsets = [0, 64], sizes = [16, 64], strides = [1, 1]} : vector<16x128xf32> to vector<16x64xf32>
    %108 = arith.negf %106 : vector<16x64xf32>
    %109 = math.exp %108 : vector<16x64xf32>
    %cst_33 = arith.constant 1.000000e+00 : f32
    %110 = vector.broadcast %cst_33 : f32 to vector<16x64xf32>
    %111 = arith.addf %110, %109 : vector<16x64xf32>
    %112 = arith.divf %110, %111 : vector<16x64xf32>
    %113 = arith.mulf %106, %112 : vector<16x64xf32>
    %114 = arith.mulf %113, %107 : vector<16x64xf32>
    %c0_34 = arith.constant 0 : index
    %c0_35 = arith.constant 0 : index
    %115 = vector.load %arg4[%c0_34, %c0_35] : memref<64x32xf32, #tpu.memory_space<vmem>>, vector<64x32xf32>
    %cst_36 = arith.constant dense<0.000000e+00> : vector<16x32xf32>
    %116 = tpu.matmul %114, %115, %cst_36 {dimension_numbers = #tpu.dot_dimension_numbers<[1], [0], [0], [1], [0, 0, 1, 1], [], []>} : vector<16x64xf32>, vector<64x32xf32>, vector<16x32xf32> -> vector<16x32xf32>
    %117 = arith.addf %93, %116 : vector<16x32xf32>
    %c0_37 = arith.constant 0 : index
    %c0_38 = arith.constant 0 : index
    %118 = vector.load %arg6[%c0_37, %c0_38] : memref<16x32xf32, #tpu.memory_space<vmem>>, vector<16x32xf32>
    tpu.vector_store %arg6[%c0_37, %c0_38], %117 {strides = array<i32>} : memref<16x32xf32, #tpu.memory_space<vmem>>, vector<16x32xf32>,
    return
  }
}

</mosaic_0001>

<llo_original>
// kernel: jdecoder_pallas.1
$region0: #{jdecoder_pallas.1}
  #allocation0 [shape = 'u32[]', space=smem, size = 0x4, offset = 0x4, fixed_abs, tag = 'smem constant byte address 0x4 - core index']
  #allocation1 [shape = 'u32[144,128]{1,0:T(1,128)}', space=vmem, size = 0x12000, scoped, tag = 'internal scratch']
  %s0 = inlined_call_operand.hbm [shape: f32[16,32], index: 0, kind: input, shape index: {}]
  %s1 = inlined_call_operand.vmem [shape: f32[32,128], index: 1, kind: input, shape index: {}]
  %s2 = inlined_call_operand.vmem [shape: f32[32,32], index: 2, kind: input, shape index: {}]
  %s3 = inlined_call_operand.vmem [shape: f32[32,128], index: 3, kind: input, shape index: {}]
  %s4 = inlined_call_operand.vmem [shape: f32[64,32], index: 4, kind: input, shape index: {}]
  %s5 = inlined_call_operand.hbm [shape: f32[16,128], index: 5, kind: input, shape index: {}]
  %s6 = inlined_call_operand.hbm [shape: f32[16,32], index: 6, kind: output, shape index: {}]
  %s7 = sld [smem:[#allocation0]]
  $region42: #{jdecoder_pallas.1} parent=0
    _
  %s9 = ssub.s32 1, %s7
  %s10 = scalar_select 0, %s9, %s7
  $region1: #{jdecoder_pallas.1} parent=0
    #allocation2 [shape = 'u8[8192]{0}', space=vmem, size = 0x2000, scoped, tag = 'input window, operand 0, single buffered']
    #allocation3 [shape = 's32[1]{0}', space=sflag, size = 0x4, scoped, tag = 'scoped memory for jdecoder_pallas.1']
    #allocation4 [shape = 's32[1]{0}', space=sflag, size = 0x4, scoped, tag = 'scoped memory for jdecoder_pallas.1']
    #allocation5 [shape = 'u8[8192]{0}', space=vmem, size = 0x2000, scoped, tag = 'input window, operand 5, single buffered']
    #allocation6 [shape = 's32[1]{0}', space=sflag, size = 0x4, scoped, tag = 'scoped memory for jdecoder_pallas.1']
    #allocation7 [shape = 'u8[8192]{0}', space=vmem, size = 0x2000, scoped, tag = 'output window, operand 0, single buffered']
    %11 = vsyncpa [#allocation3], 0
    %12 = vsyncpa [#allocation6], 0
    %13 = vsyncpa [#allocation4], 0
    // Predicated region
    $region2: #{jdecoder_pallas.1} parent=1 // pred_check
      _
    $region3: #{jdecoder_pallas.1} parent=1 // pred_check_branch
      %15 = sbr.rel (0) target = $region5
    $region4: #{jdecoder_pallas.1} parent=1 // pred_region
      %s17 = ssub.s32 256, 256
      %18 = vsyncadd [#allocation3], %s17
      %s19 = sshll.u32 [#allocation2], 4
      %s20 = int_to_ptr.vmem [resolvable:$true] %s19
      %25 = dma.hbm_to_vmem [thread:$0]  %s0, 256, %s20, [#allocation3], 128, 128, 8
    $region5: #{jdecoder_pallas.1} parent=1 // pred_fallthru
      _
    // Predicated region
    $region6: #{jdecoder_pallas.1} parent=1 // pred_check
      _
    $region7: #{jdecoder_pallas.1} parent=1 // pred_check_branch
      %27 = sbr.rel (0) target = $region9
    $region8: #{jdecoder_pallas.1} parent=1 // pred_region
      _
    $region9: #{jdecoder_pallas.1} parent=1 // pred_fallthru
      _
    // Predicated region
    $region10: #{jdecoder_pallas.1} parent=1 // pred_check
      _
    $region11: #{jdecoder_pallas.1} parent=1 // pred_check_branch
      %29 = sbr.rel (0) target = $region13
    $region12: #{jdecoder_pallas.1} parent=1 // pred_region
      _
    $region13: #{jdecoder_pallas.1} parent=1 // pred_fallthru
      _
    // Predicated region
    $region14: #{jdecoder_pallas.1} parent=1 // pred_check
      _
    $region15: #{jdecoder_pallas.1} parent=1 // pred_check_branch
      %31 = sbr.rel (0) target = $region17
    $region16: #{jdecoder_pallas.1} parent=1 // pred_region
      _
    $region17: #{jdecoder_pallas.1} parent=1 // pred_fallthru
      _
    // Predicated region
    $region18: #{jdecoder_pallas.1} parent=1 // pred_check
      _
    $region19: #{jdecoder_pallas.1} parent=1 // pred_check_branch
      %33 = sbr.rel (0) target = $region21
    $region20: #{jdecoder_pallas.1} parent=1 // pred_region
      _
    $region21: #{jdecoder_pallas.1} parent=1 // pred_fallthru
      _
    // Predicated region
    $region22: #{jdecoder_pallas.1} parent=1 // pred_check
      _
    $region23: #{jdecoder_pallas.1} parent=1 // pred_check_branch
      %35 = sbr.rel (0) target = $region25
    $region24: #{jdecoder_pallas.1} parent=1 // pred_region
      %s37 = ssub.s32 256, 256
      %38 = vsyncadd [#allocation6], %s37
      %s39 = sshll.u32 [#allocation5], 4
      %s40 = int_to_ptr.vmem [resolvable:$true] %s39
      %45 = dma.hbm_to_vmem [thread:$0]  %s5, 256, %s40, [#allocation6], 128, 128, 8
    $region25: #{jdecoder_pallas.1} parent=1 // pred_fallthru
      _
    // Predicated region
    $region26: #{jdecoder_pallas.1} parent=1 // pred_check
      _
    $region27: #{jdecoder_pallas.1} parent=1 // pred_check_branch
      %47 = sbr.rel (0) target = $region29
    $region28: #{jdecoder_pallas.1} parent=1 // pred_region
      %48 = dma.done [#allocation3], 256
    $region29: #{jdecoder_pallas.1} parent=1 // pred_fallthru
      _
    // Predicated region
    $region30: #{jdecoder_pallas.1} parent=1 // pred_check
      _
    $region31: #{jdecoder_pallas.1} parent=1 // pred_check_branch
      %50 = sbr.rel (0) target = $region33
    $region32: #{jdecoder_pallas.1} parent=1 // pred_region
      %51 = dma.done [#allocation6], 256
    $region33: #{jdecoder_pallas.1} parent=1 // pred_fallthru
      _
    %v52 = vld [vmem:[#allocation2] sm:$0xff]
    %v53 = vld [vmem:[#allocation2 + $0x8] sm:$0xff]
    %v54 = vld [vmem:[#allocation5] sm:$0xff]
    %v55 = vld [vmem:[#allocation5 + $0x8] sm:$0xff]
    %v56 = vmul.f32 %v52, %v52
    %v57 = vmul.f32 %v53, %v53
    %vm58 = vcmask 261120
    %v59 = vsel %vm58, %v56, 0.0
    %60 = vadd.xlane.f32.xlu0 %v59
    %v61 = vpop.xlane.xlu0 %60
    %v62 = vsel %vm58, %v57, 0.0
    %63 = vadd.xlane.f32.xlu0 %v62
    %v64 = vpop.xlane.xlu0 %63
    %v65 = vrcp.pop 32.0
    %v66 = vmul.f32 %v61, %v65
    %v67 = vmul.f32 %v64, %v65
    %v68 = vadd.f32 %v66, 1e-06
    %v69 = vadd.f32 %v67, 1e-06
    %v70 = vrsqrt.pop %v68
    %v71 = vrsqrt.pop %v69
    %v72 = vmul.f32 %v52, %v70
    %v73 = vmul.f32 %v53, %v71
    %v74 = vld [vmem:[%s1] sm:$0xff]
    %v75 = vld [vmem:[%s1 + $0x8] sm:$0xff]
    %v76 = vld [vmem:[%s1 + $0x10] sm:$0xff]
    %v77 = vld [vmem:[%s1 + $0x18] sm:$0xff]
    %v79 = vsel %vm58, %v72, 0
    %v82 = vsel %vm58, %v73, 0
    %84 = vmatprep.subr.mxu0 0.0
    %85 = vmatpush1.msra.mxu0 0.0
    %86 = vmatprep.subr.mxu0 0.0
    %87 = vmatpush1.msra.mxu0 0.0
    %88 = vmatprep.subr.mxu0 0.0
    %89 = vmatpush1.msra.mxu0 0.0
    %90 = vmatprep.subr.mxu0 0.0
    %91 = vmatpush1.msra.mxu0 0.0
    %92 = vmatprep.subr.mxu0 0.0
    %93 = vmatpush1.msra.mxu0 0.0
    %94 = vmatprep.subr.mxu0 0.0
    %95 = vmatpush1.msra.mxu0 0.0
    %96 = vmatprep.subr.mxu0 0.0
    %97 = vmatpush1.msra.mxu0 0.0
    %98 = vmatprep.subr.mxu0 0.0
    %99 = vmatpush1.msra.mxu0 0.0
    %100 = vmatprep.subr.mxu0 0.0
    %101 = vmatpush1.msra.mxu0 0.0
    %102 = vmatprep.subr.mxu0 0.0
    %103 = vmatpush1.msra.mxu0 0.0
    %104 = vmatprep.subr.mxu0 0.0
    %105 = vmatpush1.msra.mxu0 0.0
    %106 = vmatprep.subr.mxu0 0.0
    %107 = vmatpush1.msra.mxu0 0.0
    %108 = vmatprep.subr.mxu0 0.0
    %109 = vmatpush1.msra.mxu0 %v77
    %110 = vmatprep.subr.mxu0 0.0
    %111 = vmatpush1.msra.mxu0 %v76
    %112 = vmatprep.subr.mxu0 0.0
    %113 = vmatpush1.msra.mxu0 %v75
    %114 = vmatprep.subr.mxu0 0.0
    %115 = vmatpush1.msra.mxu0 %v74
    %116 = vmatprep.subr.mxu0 0.0
    %117 = vmatpush2.msra.mxu0 0.0
    %118 = vmatprep.subr.mxu0 0.0
    %119 = vmatpush2.msra.mxu0 0.0
    %120 = vmatprep.subr.mxu0 0.0
    %121 = vmatpush2.msra.mxu0 0.0
    %122 = vmatprep.subr.mxu0 0.0
    %123 = vmatpush2.msra.mxu0 0.0
    %124 = vmatprep.subr.mxu0 0.0
    %125 = vmatpush2.msra.mxu0 0.0
    %126 = vmatprep.subr.mxu0 0.0
    %127 = vmatpush2.msra.mxu0 0.0
    %128 = vmatprep.subr.mxu0 0.0
    %129 = vmatpush2.msra.mxu0 0.0
    %130 = vmatprep.subr.mxu0 0.0
    %131 = vmatpush2.msra.mxu0 0.0
    %132 = vmatprep.subr.mxu0 0.0
    %133 = vmatpush2.msra.mxu0 0.0
    %134 = vmatprep.subr.mxu0 0.0
    %135 = vmatpush2.msra.mxu0 0.0
    %136 = vmatprep.subr.mxu0 0.0
    %137 = vmatpush2.msra.mxu0 0.0
    %138 = vmatprep.subr.mxu0 0.0
    %139 = vmatpush2.msra.mxu0 0.0
    %140 = vmatprep.subr.mxu0 0.0
    %141 = vmatpush2.msra.mxu0 0.0
    %142 = vmatprep.subr.mxu0 0.0
    %143 = vmatpush2.msra.mxu0 0.0
    %144 = vmatprep.subr.mxu0 0.0
    %145 = vmatpush2.msra.mxu0 0.0
    %146 = vmatprep.subr.mxu0 0.0
    %147 = vmatpush2.msra.mxu0 0.0
    %148 = vmatprep.mubr.f32.mxu0 0.0
    %149 = vmatmul.mubr.f32.gmra.mxu0 %v79
    %v150 = vpop.f32.mrf.mxu0
    %v151 = vadd.f32 0.0, %v150
    %v152 = vpop.f32.mrf.mxu0
    %153 = vmatprep.mubr.f32.mxu0 0.0
    %154 = vmatmul.mubr.f32.gmra.mxu0 %v82
    %v155 = vpop.f32.mrf.mxu0
    %v156 = vadd.f32 0.0, %v155
    %v157 = vpop.f32.mrf.mxu0
    %158 = vdwg.mxu0
    %v159 = vmul.f32 %v151, %v54
    %v160 = vmul.f32 %v156, %v55
    %163 = vrot.lane.b32.xlu0 %v54, 32
    %v164 = vpop.permute.xlu0 %163
    %165 = vrot.lane.b32.xlu0 %v55, 32
    %v166 = vpop.permute.xlu0 %165
    %v169 = vmul.f32 %v151, %v164
    %v170 = vmul.f32 %v156, %v166
    %173 = vrot.lane.b32.xlu0 %v169, 64
    %v174 = vpop.permute.xlu0 %173
    %175 = vrot.lane.b32.xlu0 %v170, 64
    %v176 = vpop.permute.xlu0 %175
    %v179 = vadd.f32 %v159, %v174
    %v180 = vadd.f32 %v160, %v176
    %181 = vrot.lane.b32.xlu0 %v54, 96
    %v182 = vpop.permute.xlu0 %181
    %183 = vrot.lane.b32.xlu0 %v55, 96
    %v184 = vpop.permute.xlu0 %183
    %v187 = vmul.f32 %v151, %v182
    %v188 = vmul.f32 %v156, %v184
    %189 = vrot.lane.b32.xlu0 %v54, 16
    %v190 = vpop.permute.xlu0 %189
    %191 = vrot.lane.b32.xlu0 %v55, 16
    %v192 = vpop.permute.xlu0 %191
    %v195 = vmul.f32 %v151, %v190
    %v196 = vmul.f32 %v156, %v192
    %199 = vrot.lane.b32.xlu0 %v195, 64
    %v200 = vpop.permute.xlu0 %199
    %201 = vrot.lane.b32.xlu0 %v196, 64
    %v202 = vpop.permute.xlu0 %201
    %v205 = vadd.f32 %v187, %v200
    %v206 = vadd.f32 %v188, %v202
    %209 = vrot.lane.b32.xlu0 %v205, 96
    %v210 = vpop.permute.xlu0 %209
    %211 = vrot.lane.b32.xlu0 %v206, 96
    %v212 = vpop.permute.xlu0 %211
    %vm213 = vcmask 64512
    %v215 = vsel %vm213, %v179, 0
    %v218 = vsel %vm213, %v180, 0
    %v220 = vsel %vm213, %v210, 0
    %v222 = vsel %vm213, %v212, 0
    %224 = vmatprep.subr.mxu0 0.0
    %225 = vmatpush1.xpose.msra.mxu0 0.0
    %226 = vmatprep.subr.mxu0 0.0
    %227 = vmatpush1.xpose.msra.mxu0 0.0
    %228 = vmatprep.subr.mxu0 0.0
    %229 = vmatpush1.xpose.msra.mxu0 0.0
    %230 = vmatprep.subr.mxu0 0.0
    %231 = vmatpush1.xpose.msra.mxu0 0.0
    %232 = vmatprep.subr.mxu0 0.0
    %233 = vmatpush1.xpose.msra.mxu0 0.0
    %234 = vmatprep.subr.mxu0 0.0
    %235 = vmatpush1.xpose.msra.mxu0 0.0
    %236 = vmatprep.subr.mxu0 0.0
    %237 = vmatpush1.xpose.msra.mxu0 0.0
    %238 = vmatprep.subr.mxu0 0.0
    %239 = vmatpush1.xpose.msra.mxu0 0.0
    %240 = vmatprep.subr.mxu0 0.0
    %241 = vmatpush1.xpose.msra.mxu0 0.0
    %242 = vmatprep.subr.mxu0 0.0
    %243 = vmatpush1.xpose.msra.mxu0 0.0
    %244 = vmatprep.subr.mxu0 0.0
    %245 = vmatpush1.xpose.msra.mxu0 0.0
    %246 = vmatprep.subr.mxu0 0.0
    %247 = vmatpush1.xpose.msra.mxu0 0.0
    %248 = vmatprep.subr.mxu0 0.0
    %249 = vmatpush1.xpose.msra.mxu0 0.0
    %250 = vmatprep.subr.mxu0 0.0
    %251 = vmatpush1.xpose.msra.mxu0 0.0
    %252 = vmatprep.subr.mxu0 0.0
    %253 = vmatpush1.xpose.msra.mxu0 %v222
    %254 = vmatprep.subr.mxu0 0.0
    %255 = vmatpush1.xpose.msra.mxu0 %v220
    %256 = vmatprep.subr.mxu0 0.0
    %257 = vmatpush2.xpose.msra.mxu0 0.0
    %258 = vmatprep.subr.mxu0 0.0
    %259 = vmatpush2.xpose.msra.mxu0 0.0
    %260 = vmatprep.subr.mxu0 0.0
    %261 = vmatpush2.xpose.msra.mxu0 0.0
    %262 = vmatprep.subr.mxu0 0.0
    %263 = vmatpush2.xpose.msra.mxu0 0.0
    %264 = vmatprep.subr.mxu0 0.0
    %265 = vmatpush2.xpose.msra.mxu0 0.0
    %266 = vmatprep.subr.mxu0 0.0
    %267 = vmatpush2.xpose.msra.mxu0 0.0
    %268 = vmatprep.subr.mxu0 0.0
    %269 = vmatpush2.xpose.msra.mxu0 0.0
    %270 = vmatprep.subr.mxu0 0.0
    %271 = vmatpush2.xpose.msra.mxu0 0.0
    %272 = vmatprep.subr.mxu0 0.0
    %273 = vmatpush2.xpose.msra.mxu0 0.0
    %274 = vmatprep.subr.mxu0 0.0
    %275 = vmatpush2.xpose.msra.mxu0 0.0
    %276 = vmatprep.subr.mxu0 0.0
    %277 = vmatpush2.xpose.msra.mxu0 0.0
    %278 = vmatprep.subr.mxu0 0.0
    %279 = vmatpush2.xpose.msra.mxu0 0.0
    %280 = vmatprep.subr.mxu0 0.0
    %281 = vmatpush2.xpose.msra.mxu0 0.0
    %282 = vmatprep.subr.mxu0 0.0
    %283 = vmatpush2.xpose.msra.mxu0 0.0
    %284 = vmatprep.subr.mxu0 0.0
    %285 = vmatpush2.xpose.msra.mxu0 0.0
    %286 = vmatprep.subr.mxu0 0.0
    %287 = vmatpush2.xpose.msra.mxu0 0.0
    %288 = vmatprep.mubr.f32.mxu0 0.0
    %289 = vmatmul.mubr.f32.gmra.mxu0 %v215
    %v290 = vpop.f32.mrf.mxu0
    %v291 = vadd.f32 %v164, %v290
    %v292 = vpop.f32.mrf.mxu0
    %293 = vmatprep.mubr.f32.mxu0 0.0
    %294 = vmatmul.mubr.f32.gmra.mxu0 %v218
    %v295 = vpop.f32.mrf.mxu0
    %v296 = vadd.f32 %v166, %v295
    %v297 = vpop.f32.mrf.mxu0
    %298 = vdwg.mxu0
    %vm299 = vcmask 130048
    %v300 = vsel %vm299, %v291, -inf
    %301 = vmax.xlane.f32.xlu0 %v300
    %v302 = vpop.xlane.xlu0 %301
    %v303 = vsel %vm299, %v296, -inf
    %304 = vmax.xlane.f32.xlu0 %v303
    %v305 = vpop.xlane.xlu0 %304
    %v306 = vsub.f32 %v291, %v302
    %v307 = vsub.f32 %v296, %v305
    %v308 = vmul.f32 %v306, 1.442695
    %v309 = vpow.pop %v308
    %v310 = vmul.f32 %v307, 1.442695
    %v311 = vpow.pop %v310
    %v312 = vsel %vm299, %v309, 0.0
    %313 = vadd.xlane.f32.xlu0 %v312
    %v314 = vpop.xlane.xlu0 %313
    %v315 = vsel %vm299, %v311, 0.0
    %316 = vadd.xlane.f32.xlu0 %v315
    %v317 = vpop.xlane.xlu0 %316
    %v318 = vrcp.pop %v314
    %v319 = vmul.f32 %v309, %v318
    %v320 = vrcp.pop %v317
    %v321 = vmul.f32 %v311, %v320
    %324 = vrot.lane.b32.xlu0 %v151, 80
    %v325 = vpop.permute.xlu0 %324
    %326 = vrot.lane.b32.xlu0 %v156, 80
    %v327 = vpop.permute.xlu0 %326
    %v331 = vsel %vm299, %v319, 0
    %v334 = vsel %vm299, %v321, 0
    %336 = vmatprep.subr.mxu0 0.0
    %337 = vmatpush1.msra.mxu0 0.0
    %338 = vmatprep.subr.mxu0 0.0
    %339 = vmatpush1.msra.mxu0 0.0
    %340 = vmatprep.subr.mxu0 0.0
    %341 = vmatpush1.msra.mxu0 0.0
    %342 = vmatprep.subr.mxu0 0.0
    %343 = vmatpush1.msra.mxu0 0.0
    %344 = vmatprep.subr.mxu0 0.0
    %345 = vmatpush1.msra.mxu0 0.0
    %346 = vmatprep.subr.mxu0 0.0
    %347 = vmatpush1.msra.mxu0 0.0
    %348 = vmatprep.subr.mxu0 0.0
    %349 = vmatpush1.msra.mxu0 0.0
    %350 = vmatprep.subr.mxu0 0.0
    %351 = vmatpush1.msra.mxu0 0.0
    %352 = vmatprep.subr.mxu0 0.0
    %353 = vmatpush1.msra.mxu0 0.0
    %354 = vmatprep.subr.mxu0 0.0
    %355 = vmatpush1.msra.mxu0 0.0
    %356 = vmatprep.subr.mxu0 0.0
    %357 = vmatpush1.msra.mxu0 0.0
    %358 = vmatprep.subr.mxu0 0.0
    %359 = vmatpush1.msra.mxu0 0.0
    %360 = vmatprep.subr.mxu0 0.0
    %361 = vmatpush1.msra.mxu0 0.0
    %362 = vmatprep.subr.mxu0 0.0
    %363 = vmatpush1.msra.mxu0 0.0
    %364 = vmatprep.subr.mxu0 0.0
    %365 = vmatpush1.msra.mxu0 %v327
    %366 = vmatprep.subr.mxu0 0.0
    %367 = vmatpush1.msra.mxu0 %v325
    %368 = vmatprep.subr.mxu0 0.0
    %369 = vmatpush2.msra.mxu0 0.0
    %370 = vmatprep.subr.mxu0 0.0
    %371 = vmatpush2.msra.mxu0 0.0
    %372 = vmatprep.subr.mxu0 0.0
    %373 = vmatpush2.msra.mxu0 0.0
    %374 = vmatprep.subr.mxu0 0.0
    %375 = vmatpush2.msra.mxu0 0.0
    %376 = vmatprep.subr.mxu0 0.0
    %377 = vmatpush2.msra.mxu0 0.0
    %378 = vmatprep.subr.mxu0 0.0
    %379 = vmatpush2.msra.mxu0 0.0
    %380 = vmatprep.subr.mxu0 0.0
    %381 = vmatpush2.msra.mxu0 0.0
    %382 = vmatprep.subr.mxu0 0.0
    %383 = vmatpush2.msra.mxu0 0.0
    %384 = vmatprep.subr.mxu0 0.0
    %385 = vmatpush2.msra.mxu0 0.0
    %386 = vmatprep.subr.mxu0 0.0
    %387 = vmatpush2.msra.mxu0 0.0
    %388 = vmatprep.subr.mxu0 0.0
    %389 = vmatpush2.msra.mxu0 0.0
    %390 = vmatprep.subr.mxu0 0.0
    %391 = vmatpush2.msra.mxu0 0.0
    %392 = vmatprep.subr.mxu0 0.0
    %393 = vmatpush2.msra.mxu0 0.0
    %394 = vmatprep.subr.mxu0 0.0
    %395 = vmatpush2.msra.mxu0 0.0
    %396 = vmatprep.subr.mxu0 0.0
    %397 = vmatpush2.msra.mxu0 0.0
    %398 = vmatprep.subr.mxu0 0.0
    %399 = vmatpush2.msra.mxu0 0.0
    %400 = vmatprep.mubr.f32.mxu0 0.0
    %401 = vmatmul.mubr.f32.gmra.mxu0 %v331
    %v402 = vpop.f32.mrf.mxu0
    %v403 = vadd.f32 0.0, %v402
    %v404 = vpop.f32.mrf.mxu0
    %405 = vmatprep.mubr.f32.mxu0 0.0
    %406 = vmatmul.mubr.f32.gmra.mxu0 %v334
    %v407 = vpop.f32.mrf.mxu0
    %v408 = vadd.f32 0.0, %v407
    %v409 = vpop.f32.mrf.mxu0
    %410 = vdwg.mxu0
    %411 = vrot.lane.b32.xlu0 %v179, 120
    %v412 = vpop.permute.xlu0 %411
    %413 = vrot.lane.b32.xlu0 %v180, 120
    %v414 = vpop.permute.xlu0 %413
    %v415 = vsel %vm213, %v412, 0
    %v417 = vsel %vm213, %v414, 0
    %419 = vmatprep.subr.mxu0 0.0
    %420 = vmatpush1.xpose.msra.mxu0 0.0
    %421 = vmatprep.subr.mxu0 0.0
    %422 = vmatpush1.xpose.msra.mxu0 0.0
    %423 = vmatprep.subr.mxu0 0.0
    %424 = vmatpush1.xpose.msra.mxu0 0.0
    %425 = vmatprep.subr.mxu0 0.0
    %426 = vmatpush1.xpose.msra.mxu0 0.0
    %427 = vmatprep.subr.mxu0 0.0
    %428 = vmatpush1.xpose.msra.mxu0 0.0
    %429 = vmatprep.subr.mxu0 0.0
    %430 = vmatpush1.xpose.msra.mxu0 0.0
    %431 = vmatprep.subr.mxu0 0.0
    %432 = vmatpush1.xpose.msra.mxu0 0.0
    %433 = vmatprep.subr.mxu0 0.0
    %434 = vmatpush1.xpose.msra.mxu0 0.0
    %435 = vmatprep.subr.mxu0 0.0
    %436 = vmatpush1.xpose.msra.mxu0 0.0
    %437 = vmatprep.subr.mxu0 0.0
    %438 = vmatpush1.xpose.msra.mxu0 0.0
    %439 = vmatprep.subr.mxu0 0.0
    %440 = vmatpush1.xpose.msra.mxu0 0.0
    %441 = vmatprep.subr.mxu0 0.0
    %442 = vmatpush1.xpose.msra.mxu0 0.0
    %443 = vmatprep.subr.mxu0 0.0
    %444 = vmatpush1.xpose.msra.mxu0 0.0
    %445 = vmatprep.subr.mxu0 0.0
    %446 = vmatpush1.xpose.msra.mxu0 0.0
    %447 = vmatprep.subr.mxu0 0.0
    %448 = vmatpush1.xpose.msra.mxu0 %v222
    %449 = vmatprep.subr.mxu0 0.0
    %450 = vmatpush1.xpose.msra.mxu0 %v220
    %451 = vmatprep.subr.mxu0 0.0
    %452 = vmatpush2.xpose.msra.mxu0 0.0
    %453 = vmatprep.subr.mxu0 0.0
    %454 = vmatpush2.xpose.msra.mxu0 0.0
    %455 = vmatprep.subr.mxu0 0.0
    %456 = vmatpush2.xpose.msra.mxu0 0.0
    %457 = vmatprep.subr.mxu0 0.0
    %458 = vmatpush2.xpose.msra.mxu0 0.0
    %459 = vmatprep.subr.mxu0 0.0
    %460 = vmatpush2.xpose.msra.mxu0 0.0
    %461 = vmatprep.subr.mxu0 0.0
    %462 = vmatpush2.xpose.msra.mxu0 0.0
    %463 = vmatprep.subr.mxu0 0.0
    %464 = vmatpush2.xpose.msra.mxu0 0.0
    %465 = vmatprep.subr.mxu0 0.0
    %466 = vmatpush2.xpose.msra.mxu0 0.0
    %467 = vmatprep.subr.mxu0 0.0
    %468 = vmatpush2.xpose.msra.mxu0 0.0
    %469 = vmatprep.subr.mxu0 0.0
    %470 = vmatpush2.xpose.msra.mxu0 0.0
    %471 = vmatprep.subr.mxu0 0.0
    %472 = vmatpush2.xpose.msra.mxu0 0.0
    %473 = vmatprep.subr.mxu0 0.0
    %474 = vmatpush2.xpose.msra.mxu0 0.0
    %475 = vmatprep.subr.mxu0 0.0
    %476 = vmatpush2.xpose.msra.mxu0 0.0
    %477 = vmatprep.subr.mxu0 0.0
    %478 = vmatpush2.xpose.msra.mxu0 0.0
    %479 = vmatprep.subr.mxu0 0.0
    %480 = vmatpush2.xpose.msra.mxu0 0.0
    %481 = vmatprep.subr.mxu0 0.0
    %482 = vmatpush2.xpose.msra.mxu0 0.0
    %483 = vmatprep.mubr.f32.mxu0 0.0
    %484 = vmatmul.mubr.f32.gmra.mxu0 %v415
    %v485 = vpop.f32.mrf.mxu0
    %v486 = vadd.f32 %v164, %v485
    %v487 = vpop.f32.mrf.mxu0
    %488 = vmatprep.mubr.f32.mxu0 0.0
    %489 = vmatmul.mubr.f32.gmra.mxu0 %v417
    %v490 = vpop.f32.mrf.mxu0
    %v491 = vadd.f32 %v166, %v490
    %v492 = vpop.f32.mrf.mxu0
    %493 = vdwg.mxu0
    %v494 = vsel %vm299, %v486, -inf
    %495 = vmax.xlane.f32.xlu0 %v494
    %v496 = vpop.xlane.xlu0 %495
    %v497 = vsel %vm299, %v491, -inf
    %498 = vmax.xlane.f32.xlu0 %v497
    %v499 = vpop.xlane.xlu0 %498
    %v500 = vsub.f32 %v486, %v496
    %v501 = vsub.f32 %v491, %v499
    %v502 = vmul.f32 %v500, 1.442695
    %v503 = vpow.pop %v502
    %v504 = vmul.f32 %v501, 1.442695
    %v505 = vpow.pop %v504
    %v506 = vsel %vm299, %v503, 0.0
    %507 = vadd.xlane.f32.xlu0 %v506
    %v508 = vpop.xlane.xlu0 %507
    %v509 = vsel %vm299, %v505, 0.0
    %510 = vadd.xlane.f32.xlu0 %v509
    %v511 = vpop.xlane.xlu0 %510
    %v512 = vrcp.pop %v508
    %v513 = vmul.f32 %v503, %v512
    %v514 = vrcp.pop %v511
    %v515 = vmul.f32 %v505, %v514
    %v517 = vsel %vm299, %v513, 0
    %v520 = vsel %vm299, %v515, 0
    %522 = vmatprep.subr.mxu0 0.0
    %523 = vmatpush1.msra.mxu0 0.0
    %524 = vmatprep.subr.mxu0 0.0
    %525 = vmatpush1.msra.mxu0 0.0
    %526 = vmatprep.subr.mxu0 0.0
    %527 = vmatpush1.msra.mxu0 0.0
    %528 = vmatprep.subr.mxu0 0.0
    %529 = vmatpush1.msra.mxu0 0.0
    %530 = vmatprep.subr.mxu0 0.0
    %531 = vmatpush1.msra.mxu0 0.0
    %532 = vmatprep.subr.mxu0 0.0
    %533 = vmatpush1.msra.mxu0 0.0
    %534 = vmatprep.subr.mxu0 0.0
    %535 = vmatpush1.msra.mxu0 0.0
    %536 = vmatprep.subr.mxu0 0.0
    %537 = vmatpush1.msra.mxu0 0.0
    %538 = vmatprep.subr.mxu0 0.0
    %539 = vmatpush1.msra.mxu0 0.0
    %540 = vmatprep.subr.mxu0 0.0
    %541 = vmatpush1.msra.mxu0 0.0
    %542 = vmatprep.subr.mxu0 0.0
    %543 = vmatpush1.msra.mxu0 0.0
    %544 = vmatprep.subr.mxu0 0.0
    %545 = vmatpush1.msra.mxu0 0.0
    %546 = vmatprep.subr.mxu0 0.0
    %547 = vmatpush1.msra.mxu0 0.0
    %548 = vmatprep.subr.mxu0 0.0
    %549 = vmatpush1.msra.mxu0 0.0
    %550 = vmatprep.subr.mxu0 0.0
    %551 = vmatpush1.msra.mxu0 %v327
    %552 = vmatprep.subr.mxu0 0.0
    %553 = vmatpush1.msra.mxu0 %v325
    %554 = vmatprep.subr.mxu0 0.0
    %555 = vmatpush2.msra.mxu0 0.0
    %556 = vmatprep.subr.mxu0 0.0
    %557 = vmatpush2.msra.mxu0 0.0
    %558 = vmatprep.subr.mxu0 0.0
    %559 = vmatpush2.msra.mxu0 0.0
    %560 = vmatprep.subr.mxu0 0.0
    %561 = vmatpush2.msra.mxu0 0.0
    %562 = vmatprep.subr.mxu0 0.0
    %563 = vmatpush2.msra.mxu0 0.0
    %564 = vmatprep.subr.mxu0 0.0
    %565 = vmatpush2.msra.mxu0 0.0
    %566 = vmatprep.subr.mxu0 0.0
    %567 = vmatpush2.msra.mxu0 0.0
    %568 = vmatprep.subr.mxu0 0.0
    %569 = vmatpush2.msra.mxu0 0.0
    %570 = vmatprep.subr.mxu0 0.0
    %571 = vmatpush2.msra.mxu0 0.0
    %572 = vmatprep.subr.mxu0 0.0
    %573 = vmatpush2.msra.mxu0 0.0
    %574 = vmatprep.subr.mxu0 0.0
    %575 = vmatpush2.msra.mxu0 0.0
    %576 = vmatprep.subr.mxu0 0.0
    %577 = vmatpush2.msra.mxu0 0.0
    %578 = vmatprep.subr.mxu0 0.0
    %579 = vmatpush2.msra.mxu0 0.0
    %580 = vmatprep.subr.mxu0 0.0
    %581 = vmatpush2.msra.mxu0 0.0
    %582 = vmatprep.subr.mxu0 0.0
    %583 = vmatpush2.msra.mxu0 0.0
    %584 = vmatprep.subr.mxu0 0.0
    %585 = vmatpush2.msra.mxu0 0.0
    %586 = vmatprep.mubr.f32.mxu0 0.0
    %587 = vmatmul.mubr.f32.gmra.mxu0 %v517
    %v588 = vpop.f32.mrf.mxu0
    %v589 = vadd.f32 0.0, %v588
    %v590 = vpop.f32.mrf.mxu0
    %591 = vmatprep.mubr.f32.mxu0 0.0
    %592 = vmatmul.mubr.f32.gmra.mxu0 %v520
    %v593 = vpop.f32.mrf.mxu0
    %v594 = vadd.f32 0.0, %v593
    %v595 = vpop.f32.mrf.mxu0
    %596 = vdwg.mxu0
    %597 = vrot.lane.b32.xlu0 %v179, 112
    %v598 = vpop.permute.xlu0 %597
    %599 = vrot.lane.b32.xlu0 %v180, 112
    %v600 = vpop.permute.xlu0 %599
    %601 = vrot.lane.b32.xlu0 %v205, 88
    %v602 = vpop.permute.xlu0 %601
    %603 = vrot.lane.b32.xlu0 %v206, 88
    %v604 = vpop.permute.xlu0 %603
    %v605 = vsel %vm213, %v598, 0
    %v607 = vsel %vm213, %v600, 0
    %v609 = vsel %vm213, %v602, 0
    %v611 = vsel %vm213, %v604, 0
    %613 = vmatprep.subr.mxu0 0.0
    %614 = vmatpush1.xpose.msra.mxu0 0.0
    %615 = vmatprep.subr.mxu0 0.0
    %616 = vmatpush1.xpose.msra.mxu0 0.0
    %617 = vmatprep.subr.mxu0 0.0
    %618 = vmatpush1.xpose.msra.mxu0 0.0
    %619 = vmatprep.subr.mxu0 0.0
    %620 = vmatpush1.xpose.msra.mxu0 0.0
    %621 = vmatprep.subr.mxu0 0.0
    %622 = vmatpush1.xpose.msra.mxu0 0.0
    %623 = vmatprep.subr.mxu0 0.0
    %624 = vmatpush1.xpose.msra.mxu0 0.0
    %625 = vmatprep.subr.mxu0 0.0
    %626 = vmatpush1.xpose.msra.mxu0 0.0
    %627 = vmatprep.subr.mxu0 0.0
    %628 = vmatpush1.xpose.msra.mxu0 0.0
    %629 = vmatprep.subr.mxu0 0.0
    %630 = vmatpush1.xpose.msra.mxu0 0.0
    %631 = vmatprep.subr.mxu0 0.0
    %632 = vmatpush1.xpose.msra.mxu0 0.0
    %633 = vmatprep.subr.mxu0 0.0
    %634 = vmatpush1.xpose.msra.mxu0 0.0
    %635 = vmatprep.subr.mxu0 0.0
    %636 = vmatpush1.xpose.msra.mxu0 0.0
    %637 = vmatprep.subr.mxu0 0.0
    %638 = vmatpush1.xpose.msra.mxu0 0.0
    %639 = vmatprep.subr.mxu0 0.0
    %640 = vmatpush1.xpose.msra.mxu0 0.0
    %641 = vmatprep.subr.mxu0 0.0
    %642 = vmatpush1.xpose.msra.mxu0 %v611
    %643 = vmatprep.subr.mxu0 0.0
    %644 = vmatpush1.xpose.msra.mxu0 %v609
    %645 = vmatprep.subr.mxu0 0.0
    %646 = vmatpush2.xpose.msra.mxu0 0.0
    %647 = vmatprep.subr.mxu0 0.0
    %648 = vmatpush2.xpose.msra.mxu0 0.0
    %649 = vmatprep.subr.mxu0 0.0
    %650 = vmatpush2.xpose.msra.mxu0 0.0
    %651 = vmatprep.subr.mxu0 0.0
    %652 = vmatpush2.xpose.msra.mxu0 0.0
    %653 = vmatprep.subr.mxu0 0.0
    %654 = vmatpush2.xpose.msra.mxu0 0.0
    %655 = vmatprep.subr.mxu0 0.0
    %656 = vmatpush2.xpose.msra.mxu0 0.0
    %657 = vmatprep.subr.mxu0 0.0
    %658 = vmatpush2.xpose.msra.mxu0 0.0
    %659 = vmatprep.subr.mxu0 0.0
    %660 = vmatpush2.xpose.msra.mxu0 0.0
    %661 = vmatprep.subr.mxu0 0.0
    %662 = vmatpush2.xpose.msra.mxu0 0.0
    %663 = vmatprep.subr.mxu0 0.0
    %664 = vmatpush2.xpose.msra.mxu0 0.0
    %665 = vmatprep.subr.mxu0 0.0
    %666 = vmatpush2.xpose.msra.mxu0 0.0
    %667 = vmatprep.subr.mxu0 0.0
    %668 = vmatpush2.xpose.msra.mxu0 0.0
    %669 = vmatprep.subr.mxu0 0.0
    %670 = vmatpush2.xpose.msra.mxu0 0.0
    %671 = vmatprep.subr.mxu0 0.0
    %672 = vmatpush2.xpose.msra.mxu0 0.0
    %673 = vmatprep.subr.mxu0 0.0
    %674 = vmatpush2.xpose.msra.mxu0 0.0
    %675 = vmatprep.subr.mxu0 0.0
    %676 = vmatpush2.xpose.msra.mxu0 0.0
    %677 = vmatprep.mubr.f32.mxu0 0.0
    %678 = vmatmul.mubr.f32.gmra.mxu0 %v605
    %v679 = vpop.f32.mrf.mxu0
    %v680 = vadd.f32 %v164, %v679
    %v681 = vpop.f32.mrf.mxu0
    %682 = vmatprep.mubr.f32.mxu0 0.0
    %683 = vmatmul.mubr.f32.gmra.mxu0 %v607
    %v684 = vpop.f32.mrf.mxu0
    %v685 = vadd.f32 %v166, %v684
    %v686 = vpop.f32.mrf.mxu0
    %687 = vdwg.mxu0
    %v688 = vsel %vm299, %v680, -inf
    %689 = vmax.xlane.f32.xlu0 %v688
    %v690 = vpop.xlane.xlu0 %689
    %v691 = vsel %vm299, %v685, -inf
    %692 = vmax.xlane.f32.xlu0 %v691
    %v693 = vpop.xlane.xlu0 %692
    %v694 = vsub.f32 %v680, %v690
    %v695 = vsub.f32 %v685, %v693
    %v696 = vmul.f32 %v694, 1.442695
    %v697 = vpow.pop %v696
    %v698 = vmul.f32 %v695, 1.442695
    %v699 = vpow.pop %v698
    %v700 = vsel %vm299, %v697, 0.0
    %701 = vadd.xlane.f32.xlu0 %v700
    %v702 = vpop.xlane.xlu0 %701
    %v703 = vsel %vm299, %v699, 0.0
    %704 = vadd.xlane.f32.xlu0 %v703
    %v705 = vpop.xlane.xlu0 %704
    %v706 = vrcp.pop %v702
    %v707 = vmul.f32 %v697, %v706
    %v708 = vrcp.pop %v705
    %v709 = vmul.f32 %v699, %v708
    %710 = vrot.lane.b32.xlu0 %v151, 72
    %v711 = vpop.permute.xlu0 %710
    %712 = vrot.lane.b32.xlu0 %v156, 72
    %v713 = vpop.permute.xlu0 %712
    %v717 = vsel %vm299, %v707, 0
    %v720 = vsel %vm299, %v709, 0
    %722 = vmatprep.subr.mxu0 0.0
    %723 = vmatpush1.msra.mxu0 0.0
    %724 = vmatprep.subr.mxu0 0.0
    %725 = vmatpush1.msra.mxu0 0.0
    %726 = vmatprep.subr.mxu0 0.0
    %727 = vmatpush1.msra.mxu0 0.0
    %728 = vmatprep.subr.mxu0 0.0
    %729 = vmatpush1.msra.mxu0 0.0
    %730 = vmatprep.subr.mxu0 0.0
    %731 = vmatpush1.msra.mxu0 0.0
    %732 = vmatprep.subr.mxu0 0.0
    %733 = vmatpush1.msra.mxu0 0.0
    %734 = vmatprep.subr.mxu0 0.0
    %735 = vmatpush1.msra.mxu0 0.0
    %736 = vmatprep.subr.mxu0 0.0
    %737 = vmatpush1.msra.mxu0 0.0
    %738 = vmatprep.subr.mxu0 0.0
    %739 = vmatpush1.msra.mxu0 0.0
    %740 = vmatprep.subr.mxu0 0.0
    %741 = vmatpush1.msra.mxu0 0.0
    %742 = vmatprep.subr.mxu0 0.0
    %743 = vmatpush1.msra.mxu0 0.0
    %744 = vmatprep.subr.mxu0 0.0
    %745 = vmatpush1.msra.mxu0 0.0
    %746 = vmatprep.subr.mxu0 0.0
    %747 = vmatpush1.msra.mxu0 0.0
    %748 = vmatprep.subr.mxu0 0.0
    %749 = vmatpush1.msra.mxu0 0.0
    %750 = vmatprep.subr.mxu0 0.0
    %751 = vmatpush1.msra.mxu0 %v713
    %752 = vmatprep.subr.mxu0 0.0
    %753 = vmatpush1.msra.mxu0 %v711
    %754 = vmatprep.subr.mxu0 0.0
    %755 = vmatpush2.msra.mxu0 0.0
    %756 = vmatprep.subr.mxu0 0.0
    %757 = vmatpush2.msra.mxu0 0.0
    %758 = vmatprep.subr.mxu0 0.0
    %759 = vmatpush2.msra.mxu0 0.0
    %760 = vmatprep.subr.mxu0 0.0
    %761 = vmatpush2.msra.mxu0 0.0
    %762 = vmatprep.subr.mxu0 0.0
    %763 = vmatpush2.msra.mxu0 0.0
    %764 = vmatprep.subr.mxu0 0.0
    %765 = vmatpush2.msra.mxu0 0.0
    %766 = vmatprep.subr.mxu0 0.0
    %767 = vmatpush2.msra.mxu0 0.0
    %768 = vmatprep.subr.mxu0 0.0
    %769 = vmatpush2.msra.mxu0 0.0
    %770 = vmatprep.subr.mxu0 0.0
    %771 = vmatpush2.msra.mxu0 0.0
    %772 = vmatprep.subr.mxu0 0.0
    %773 = vmatpush2.msra.mxu0 0.0
    %774 = vmatprep.subr.mxu0 0.0
    %775 = vmatpush2.msra.mxu0 0.0
    %776 = vmatprep.subr.mxu0 0.0
    %777 = vmatpush2.msra.mxu0 0.0
    %778 = vmatprep.subr.mxu0 0.0
    %779 = vmatpush2.msra.mxu0 0.0
    %780 = vmatprep.subr.mxu0 0.0
    %781 = vmatpush2.msra.mxu0 0.0
    %782 = vmatprep.subr.mxu0 0.0
    %783 = vmatpush2.msra.mxu0 0.0
    %784 = vmatprep.subr.mxu0 0.0
    %785 = vmatpush2.msra.mxu0 0.0
    %786 = vmatprep.mubr.f32.mxu0 0.0
    %787 = vmatmul.mubr.f32.gmra.mxu0 %v717
    %v788 = vpop.f32.mrf.mxu0
    %v789 = vadd.f32 0.0, %v788
    %v790 = vpop.f32.mrf.mxu0
    %791 = vmatprep.mubr.f32.mxu0 0.0
    %792 = vmatmul.mubr.f32.gmra.mxu0 %v720
    %v793 = vpop.f32.mrf.mxu0
    %v794 = vadd.f32 0.0, %v793
    %v795 = vpop.f32.mrf.mxu0
    %796 = vdwg.mxu0
    %797 = vrot.lane.b32.xlu0 %v179, 104
    %v798 = vpop.permute.xlu0 %797
    %799 = vrot.lane.b32.xlu0 %v180, 104
    %v800 = vpop.permute.xlu0 %799
    %v801 = vsel %vm213, %v798, 0
    %v803 = vsel %vm213, %v800, 0
    %805 = vmatprep.subr.mxu0 0.0
    %806 = vmatpush1.xpose.msra.mxu0 0.0
    %807 = vmatprep.subr.mxu0 0.0
    %808 = vmatpush1.xpose.msra.mxu0 0.0
    %809 = vmatprep.subr.mxu0 0.0
    %810 = vmatpush1.xpose.msra.mxu0 0.0
    %811 = vmatprep.subr.mxu0 0.0
    %812 = vmatpush1.xpose.msra.mxu0 0.0
    %813 = vmatprep.subr.mxu0 0.0
    %814 = vmatpush1.xpose.msra.mxu0 0.0
    %815 = vmatprep.subr.mxu0 0.0
    %816 = vmatpush1.xpose.msra.mxu0 0.0
    %817 = vmatprep.subr.mxu0 0.0
    %818 = vmatpush1.xpose.msra.mxu0 0.0
    %819 = vmatprep.subr.mxu0 0.0
    %820 = vmatpush1.xpose.msra.mxu0 0.0
    %821 = vmatprep.subr.mxu0 0.0
    %822 = vmatpush1.xpose.msra.mxu0 0.0
    %823 = vmatprep.subr.mxu0 0.0
    %824 = vmatpush1.xpose.msra.mxu0 0.0
    %825 = vmatprep.subr.mxu0 0.0
    %826 = vmatpush1.xpose.msra.mxu0 0.0
    %827 = vmatprep.subr.mxu0 0.0
    %828 = vmatpush1.xpose.msra.mxu0 0.0
    %829 = vmatprep.subr.mxu0 0.0
    %830 = vmatpush1.xpose.msra.mxu0 0.0
    %831 = vmatprep.subr.mxu0 0.0
    %832 = vmatpush1.xpose.msra.mxu0 0.0
    %833 = vmatprep.subr.mxu0 0.0
    %834 = vmatpush1.xpose.msra.mxu0 %v611
    %835 = vmatprep.subr.mxu0 0.0
    %836 = vmatpush1.xpose.msra.mxu0 %v609
    %837 = vmatprep.subr.mxu0 0.0
    %838 = vmatpush2.xpose.msra.mxu0 0.0
    %839 = vmatprep.subr.mxu0 0.0
    %840 = vmatpush2.xpose.msra.mxu0 0.0
    %841 = vmatprep.subr.mxu0 0.0
    %842 = vmatpush2.xpose.msra.mxu0 0.0
    %843 = vmatprep.subr.mxu0 0.0
    %844 = vmatpush2.xpose.msra.mxu0 0.0
    %845 = vmatprep.subr.mxu0 0.0
    %846 = vmatpush2.xpose.msra.mxu0 0.0
    %847 = vmatprep.subr.mxu0 0.0
    %848 = vmatpush2.xpose.msra.mxu0 0.0
    %849 = vmatprep.subr.mxu0 0.0
    %850 = vmatpush2.xpose.msra.mxu0 0.0
    %851 = vmatprep.subr.mxu0 0.0
    %852 = vmatpush2.xpose.msra.mxu0 0.0
    %853 = vmatprep.subr.mxu0 0.0
    %854 = vmatpush2.xpose.msra.mxu0 0.0
    %855 = vmatprep.subr.mxu0 0.0
    %856 = vmatpush2.xpose.msra.mxu0 0.0
    %857 = vmatprep.subr.mxu0 0.0
    %858 = vmatpush2.xpose.msra.mxu0 0.0
    %859 = vmatprep.subr.mxu0 0.0
    %860 = vmatpush2.xpose.msra.mxu0 0.0
    %861 = vmatprep.subr.mxu0 0.0
    %862 = vmatpush2.xpose.msra.mxu0 0.0
    %863 = vmatprep.subr.mxu0 0.0
    %864 = vmatpush2.xpose.msra.mxu0 0.0
    %865 = vmatprep.subr.mxu0 0.0
    %866 = vmatpush2.xpose.msra.mxu0 0.0
    %867 = vmatprep.subr.mxu0 0.0
    %868 = vmatpush2.xpose.msra.mxu0 0.0
    %869 = vmatprep.mubr.f32.mxu0 0.0
    %870 = vmatmul.mubr.f32.gmra.mxu0 %v801
    %v871 = vpop.f32.mrf.mxu0
    %v872 = vadd.f32 %v164, %v871
    %v873 = vpop.f32.mrf.mxu0
    %874 = vmatprep.mubr.f32.mxu0 0.0
    %875 = vmatmul.mubr.f32.gmra.mxu0 %v803
    %v876 = vpop.f32.mrf.mxu0
    %v877 = vadd.f32 %v166, %v876
    %v878 = vpop.f32.mrf.mxu0
    %879 = vdwg.mxu0
    %v880 = vsel %vm299, %v872, -inf
    %881 = vmax.xlane.f32.xlu0 %v880
    %v882 = vpop.xlane.xlu0 %881
    %v883 = vsel %vm299, %v877, -inf
    %884 = vmax.xlane.f32.xlu0 %v883
    %v885 = vpop.xlane.xlu0 %884
    %v886 = vsub.f32 %v872, %v882
    %v887 = vsub.f32 %v877, %v885
    %v888 = vmul.f32 %v886, 1.442695
    %v889 = vpow.pop %v888
    %v890 = vmul.f32 %v887, 1.442695
    %v891 = vpow.pop %v890
    %v892 = vsel %vm299, %v889, 0.0
    %893 = vadd.xlane.f32.xlu0 %v892
    %v894 = vpop.xlane.xlu0 %893
    %v895 = vsel %vm299, %v891, 0.0
    %896 = vadd.xlane.f32.xlu0 %v895
    %v897 = vpop.xlane.xlu0 %896
    %v898 = vrcp.pop %v894
    %v899 = vmul.f32 %v889, %v898
    %v900 = vrcp.pop %v897
    %v901 = vmul.f32 %v891, %v900
    %v903 = vsel %vm299, %v899, 0
    %v906 = vsel %vm299, %v901, 0
    %908 = vmatprep.subr.mxu0 0.0
    %909 = vmatpush1.msra.mxu0 0.0
    %910 = vmatprep.subr.mxu0 0.0
    %911 = vmatpush1.msra.mxu0 0.0
    %912 = vmatprep.subr.mxu0 0.0
    %913 = vmatpush1.msra.mxu0 0.0
    %914 = vmatprep.subr.mxu0 0.0
    %915 = vmatpush1.msra.mxu0 0.0
    %916 = vmatprep.subr.mxu0 0.0
    %917 = vmatpush1.msra.mxu0 0.0
    %918 = vmatprep.subr.mxu0 0.0
    %919 = vmatpush1.msra.mxu0 0.0
    %920 = vmatprep.subr.mxu0 0.0
    %921 = vmatpush1.msra.mxu0 0.0
    %922 = vmatprep.subr.mxu0 0.0
    %923 = vmatpush1.msra.mxu0 0.0
    %924 = vmatprep.subr.mxu0 0.0
    %925 = vmatpush1.msra.mxu0 0.0
    %926 = vmatprep.subr.mxu0 0.0
    %927 = vmatpush1.msra.mxu0 0.0
    %928 = vmatprep.subr.mxu0 0.0
    %929 = vmatpush1.msra.mxu0 0.0
    %930 = vmatprep.subr.mxu0 0.0
    %931 = vmatpush1.msra.mxu0 0.0
    %932 = vmatprep.subr.mxu0 0.0
    %933 = vmatpush1.msra.mxu0 0.0
    %934 = vmatprep.subr.mxu0 0.0
    %935 = vmatpush1.msra.mxu0 0.0
    %936 = vmatprep.subr.mxu0 0.0
    %937 = vmatpush1.msra.mxu0 %v713
    %938 = vmatprep.subr.mxu0 0.0
    %939 = vmatpush1.msra.mxu0 %v711
    %940 = vmatprep.subr.mxu0 0.0
    %941 = vmatpush2.msra.mxu0 0.0
    %942 = vmatprep.subr.mxu0 0.0
    %943 = vmatpush2.msra.mxu0 0.0
    %944 = vmatprep.subr.mxu0 0.0
    %945 = vmatpush2.msra.mxu0 0.0
    %946 = vmatprep.subr.mxu0 0.0
    %947 = vmatpush2.msra.mxu0 0.0
    %948 = vmatprep.subr.mxu0 0.0
    %949 = vmatpush2.msra.mxu0 0.0
    %950 = vmatprep.subr.mxu0 0.0
    %951 = vmatpush2.msra.mxu0 0.0
    %952 = vmatprep.subr.mxu0 0.0
    %953 = vmatpush2.msra.mxu0 0.0
    %954 = vmatprep.subr.mxu0 0.0
    %955 = vmatpush2.msra.mxu0 0.0
    %956 = vmatprep.subr.mxu0 0.0
    %957 = vmatpush2.msra.mxu0 0.0
    %958 = vmatprep.subr.mxu0 0.0
    %959 = vmatpush2.msra.mxu0 0.0
    %960 = vmatprep.subr.mxu0 0.0
    %961 = vmatpush2.msra.mxu0 0.0
    %962 = vmatprep.subr.mxu0 0.0
    %963 = vmatpush2.msra.mxu0 0.0
    %964 = vmatprep.subr.mxu0 0.0
    %965 = vmatpush2.msra.mxu0 0.0
    %966 = vmatprep.subr.mxu0 0.0
    %967 = vmatpush2.msra.mxu0 0.0
    %968 = vmatprep.subr.mxu0 0.0
    %969 = vmatpush2.msra.mxu0 0.0
    %970 = vmatprep.subr.mxu0 0.0
    %971 = vmatpush2.msra.mxu0 0.0
    %972 = vmatprep.mubr.f32.mxu0 0.0
    %973 = vmatmul.mubr.f32.gmra.mxu0 %v903
    %v974 = vpop.f32.mrf.mxu0
    %v975 = vadd.f32 0.0, %v974
    %v976 = vpop.f32.mrf.mxu0
    %977 = vmatprep.mubr.f32.mxu0 0.0
    %978 = vmatmul.mubr.f32.gmra.mxu0 %v906
    %v979 = vpop.f32.mrf.mxu0
    %v980 = vadd.f32 0.0, %v979
    %v981 = vpop.f32.mrf.mxu0
    %982 = vdwg.mxu0
    %985 = vrot.lane.b32.xlu0 %v589, 8
    %v986 = vpop.permute.xlu0 %985
    %987 = vrot.lane.b32.xlu0 %v594, 8
    %v988 = vpop.permute.xlu0 %987
    %993 = vrot.lane.b32.xlu0 %v789, 16
    %v994 = vpop.permute.xlu0 %993
    %995 = vrot.lane.b32.xlu0 %v794, 16
    %v996 = vpop.permute.xlu0 %995
    %1001 = vrot.lane.b32.xlu0 %v975, 24
    %v1002 = vpop.permute.xlu0 %1001
    %1003 = vrot.lane.b32.xlu0 %v980, 24
    %v1004 = vpop.permute.xlu0 %1003
    %v1007 = vsel %vm213, %v403, %v986
    %v1008 = vsel %vm213, %v408, %v988
    %v1009 = vsel %vm299, %v1007, %v994
    %v1010 = vsel %vm299, %v1008, %v996
    %vm1011 = vcmask 195584
    %v1012 = vsel %vm1011, %v1009, %v1002
    %v1013 = vsel %vm1011, %v1010, %v1004
    %v1014 = vld [vmem:[%s2] sm:$0xff]
    %v1015 = vld [vmem:[%s2 + $0x8] sm:$0xff]
    %v1016 = vld [vmem:[%s2 + $0x10] sm:$0xff]
    %v1017 = vld [vmem:[%s2 + $0x18] sm:$0xff]
    %v1019 = vsel %vm58, %v1012, 0
    %v1022 = vsel %vm58, %v1013, 0
    %1024 = vmatprep.subr.mxu0 0.0
    %1025 = vmatpush1.msra.mxu0 0.0
    %1026 = vmatprep.subr.mxu0 0.0
    %1027 = vmatpush1.msra.mxu0 0.0
    %1028 = vmatprep.subr.mxu0 0.0
    %1029 = vmatpush1.msra.mxu0 0.0
    %1030 = vmatprep.subr.mxu0 0.0
    %1031 = vmatpush1.msra.mxu0 0.0
    %1032 = vmatprep.subr.mxu0 0.0
    %1033 = vmatpush1.msra.mxu0 0.0
    %1034 = vmatprep.subr.mxu0 0.0
    %1035 = vmatpush1.msra.mxu0 0.0
    %1036 = vmatprep.subr.mxu0 0.0
    %1037 = vmatpush1.msra.mxu0 0.0
    %1038 = vmatprep.subr.mxu0 0.0
    %1039 = vmatpush1.msra.mxu0 0.0
    %1040 = vmatprep.subr.mxu0 0.0
    %1041 = vmatpush1.msra.mxu0 0.0
    %1042 = vmatprep.subr.mxu0 0.0
    %1043 = vmatpush1.msra.mxu0 0.0
    %1044 = vmatprep.subr.mxu0 0.0
    %1045 = vmatpush1.msra.mxu0 0.0
    %1046 = vmatprep.subr.mxu0 0.0
    %1047 = vmatpush1.msra.mxu0 0.0
    %1048 = vmatprep.subr.mxu0 0.0
    %1049 = vmatpush1.msra.mxu0 %v1017
    %1050 = vmatprep.subr.mxu0 0.0
    %1051 = vmatpush1.msra.mxu0 %v1016
    %1052 = vmatprep.subr.mxu0 0.0
    %1053 = vmatpush1.msra.mxu0 %v1015
    %1054 = vmatprep.subr.mxu0 0.0
    %1055 = vmatpush1.msra.mxu0 %v1014
    %1056 = vmatprep.subr.mxu0 0.0
    %1057 = vmatpush2.msra.mxu0 0.0
    %1058 = vmatprep.subr.mxu0 0.0
    %1059 = vmatpush2.msra.mxu0 0.0
    %1060 = vmatprep.subr.mxu0 0.0
    %1061 = vmatpush2.msra.mxu0 0.0
    %1062 = vmatprep.subr.mxu0 0.0
    %1063 = vmatpush2.msra.mxu0 0.0
    %1064 = vmatprep.subr.mxu0 0.0
    %1065 = vmatpush2.msra.mxu0 0.0
    %1066 = vmatprep.subr.mxu0 0.0
    %1067 = vmatpush2.msra.mxu0 0.0
    %1068 = vmatprep.subr.mxu0 0.0
    %1069 = vmatpush2.msra.mxu0 0.0
    %1070 = vmatprep.subr.mxu0 0.0
    %1071 = vmatpush2.msra.mxu0 0.0
    %1072 = vmatprep.subr.mxu0 0.0
    %1073 = vmatpush2.msra.mxu0 0.0
    %1074 = vmatprep.subr.mxu0 0.0
    %1075 = vmatpush2.msra.mxu0 0.0
    %1076 = vmatprep.subr.mxu0 0.0
    %1077 = vmatpush2.msra.mxu0 0.0
    %1078 = vmatprep.subr.mxu0 0.0
    %1079 = vmatpush2.msra.mxu0 0.0
    %1080 = vmatprep.subr.mxu0 0.0
    %1081 = vmatpush2.msra.mxu0 0.0
    %1082 = vmatprep.subr.mxu0 0.0
    %1083 = vmatpush2.msra.mxu0 0.0
    %1084 = vmatprep.subr.mxu0 0.0
    %1085 = vmatpush2.msra.mxu0 0.0
    %1086 = vmatprep.subr.mxu0 0.0
    %1087 = vmatpush2.msra.mxu0 0.0
    %1088 = vmatprep.mubr.f32.mxu0 0.0
    %1089 = vmatmul.mubr.f32.gmra.mxu0 %v1019
    %v1090 = vpop.f32.mrf.mxu0
    %v1091 = vadd.f32 0.0, %v1090
    %v1092 = vpop.f32.mrf.mxu0
    %1093 = vmatprep.mubr.f32.mxu0 0.0
    %1094 = vmatmul.mubr.f32.gmra.mxu0 %v1022
    %v1095 = vpop.f32.mrf.mxu0
    %v1096 = vadd.f32 0.0, %v1095
    %v1097 = vpop.f32.mrf.mxu0
    %1098 = vdwg.mxu0
    %v1099 = vadd.f32 %v52, %v1091
    %v1100 = vadd.f32 %v53, %v1096
    %v1101 = vmul.f32 %v1099, %v1099
    %v1102 = vmul.f32 %v1100, %v1100
    %v1103 = vsel %vm58, %v1101, 0.0
    %1104 = vadd.xlane.f32.xlu0 %v1103
    %v1105 = vpop.xlane.xlu0 %1104
    %v1106 = vsel %vm58, %v1102, 0.0
    %1107 = vadd.xlane.f32.xlu0 %v1106
    %v1108 = vpop.xlane.xlu0 %1107
    %v1109 = vmul.f32 %v1105, %v65
    %v1110 = vmul.f32 %v1108, %v65
    %v1111 = vadd.f32 %v1109, 1e-06
    %v1112 = vadd.f32 %v1110, 1e-06
    %v1113 = vrsqrt.pop %v1111
    %v1114 = vrsqrt.pop %v1112
    %v1115 = vmul.f32 %v1099, %v1113
    %v1116 = vmul.f32 %v1100, %v1114
    %v1117 = vld [vmem:[%s3] sm:$0xff]
    %v1118 = vld [vmem:[%s3 + $0x8] sm:$0xff]
    %v1119 = vld [vmem:[%s3 + $0x10] sm:$0xff]
    %v1120 = vld [vmem:[%s3 + $0x18] sm:$0xff]
    %v1122 = vsel %vm58, %v1115, 0
    %v1125 = vsel %vm58, %v1116, 0
    %1127 = vmatprep.subr.mxu0 0.0
    %1128 = vmatpush1.msra.mxu0 0.0
    %1129 = vmatprep.subr.mxu0 0.0
    %1130 = vmatpush1.msra.mxu0 0.0
    %1131 = vmatprep.subr.mxu0 0.0
    %1132 = vmatpush1.msra.mxu0 0.0
    %1133 = vmatprep.subr.mxu0 0.0
    %1134 = vmatpush1.msra.mxu0 0.0
    %1135 = vmatprep.subr.mxu0 0.0
    %1136 = vmatpush1.msra.mxu0 0.0
    %1137 = vmatprep.subr.mxu0 0.0
    %1138 = vmatpush1.msra.mxu0 0.0
    %1139 = vmatprep.subr.mxu0 0.0
    %1140 = vmatpush1.msra.mxu0 0.0
    %1141 = vmatprep.subr.mxu0 0.0
    %1142 = vmatpush1.msra.mxu0 0.0
    %1143 = vmatprep.subr.mxu0 0.0
    %1144 = vmatpush1.msra.mxu0 0.0
    %1145 = vmatprep.subr.mxu0 0.0
    %1146 = vmatpush1.msra.mxu0 0.0
    %1147 = vmatprep.subr.mxu0 0.0
    %1148 = vmatpush1.msra.mxu0 0.0
    %1149 = vmatprep.subr.mxu0 0.0
    %1150 = vmatpush1.msra.mxu0 0.0
    %1151 = vmatprep.subr.mxu0 0.0
    %1152 = vmatpush1.msra.mxu0 %v1120
    %1153 = vmatprep.subr.mxu0 0.0
    %1154 = vmatpush1.msra.mxu0 %v1119
    %1155 = vmatprep.subr.mxu0 0.0
    %1156 = vmatpush1.msra.mxu0 %v1118
    %1157 = vmatprep.subr.mxu0 0.0
    %1158 = vmatpush1.msra.mxu0 %v1117
    %1159 = vmatprep.subr.mxu0 0.0
    %1160 = vmatpush2.msra.mxu0 0.0
    %1161 = vmatprep.subr.mxu0 0.0
    %1162 = vmatpush2.msra.mxu0 0.0
    %1163 = vmatprep.subr.mxu0 0.0
    %1164 = vmatpush2.msra.mxu0 0.0
    %1165 = vmatprep.subr.mxu0 0.0
    %1166 = vmatpush2.msra.mxu0 0.0
    %1167 = vmatprep.subr.mxu0 0.0
    %1168 = vmatpush2.msra.mxu0 0.0
    %1169 = vmatprep.subr.mxu0 0.0
    %1170 = vmatpush2.msra.mxu0 0.0
    %1171 = vmatprep.subr.mxu0 0.0
    %1172 = vmatpush2.msra.mxu0 0.0
    %1173 = vmatprep.subr.mxu0 0.0
    %1174 = vmatpush2.msra.mxu0 0.0
    %1175 = vmatprep.subr.mxu0 0.0
    %1176 = vmatpush2.msra.mxu0 0.0
    %1177 = vmatprep.subr.mxu0 0.0
    %1178 = vmatpush2.msra.mxu0 0.0
    %1179 = vmatprep.subr.mxu0 0.0
    %1180 = vmatpush2.msra.mxu0 0.0
    %1181 = vmatprep.subr.mxu0 0.0
    %1182 = vmatpush2.msra.mxu0 0.0
    %1183 = vmatprep.subr.mxu0 0.0
    %1184 = vmatpush2.msra.mxu0 0.0
    %1185 = vmatprep.subr.mxu0 0.0
    %1186 = vmatpush2.msra.mxu0 0.0
    %1187 = vmatprep.subr.mxu0 0.0
    %1188 = vmatpush2.msra.mxu0 0.0
    %1189 = vmatprep.subr.mxu0 0.0
    %1190 = vmatpush2.msra.mxu0 0.0
    %1191 = vmatprep.mubr.f32.mxu0 0.0
    %1192 = vmatmul.mubr.f32.gmra.mxu0 %v1122
    %v1193 = vpop.f32.mrf.mxu0
    %v1194 = vadd.f32 0.0, %v1193
    %v1195 = vpop.f32.mrf.mxu0
    %1196 = vmatprep.mubr.f32.mxu0 0.0
    %1197 = vmatmul.mubr.f32.gmra.mxu0 %v1125
    %v1198 = vpop.f32.mrf.mxu0
    %v1199 = vadd.f32 0.0, %v1198
    %v1200 = vpop.f32.mrf.mxu0
    %1201 = vdwg.mxu0
    %v1202 = vxor.u32 %v1194, 2147483648
    %v1203 = vxor.u32 %v1199, 2147483648
    %v1204 = vmul.f32 %v1202, 1.442695
    %v1205 = vpow.pop %v1204
    %v1206 = vmul.f32 %v1203, 1.442695
    %v1207 = vpow.pop %v1206
    %v1208 = vadd.f32 %v1205, 1.0
    %v1209 = vadd.f32 %v1207, 1.0
    %v1210 = vrcp.pop %v1208
    %v1211 = vmul.f32 1.0, %v1210
    %v1212 = vrcp.pop %v1209
    %v1213 = vmul.f32 1.0, %v1212
    %v1214 = vmul.f32 %v1194, %v1211
    %v1215 = vmul.f32 %v1199, %v1213
    %1218 = vrot.lane.b32.xlu0 %v1194, 64
    %v1219 = vpop.permute.xlu0 %1218
    %1220 = vrot.lane.b32.xlu0 %v1199, 64
    %v1221 = vpop.permute.xlu0 %1220
    %v1224 = vmul.f32 %v1214, %v1219
    %v1225 = vmul.f32 %v1215, %v1221
    %v1226 = vld [vmem:[%s4] sm:$0xff]
    %v1227 = vld [vmem:[%s4 + $0x8] sm:$0xff]
    %v1228 = vld [vmem:[%s4 + $0x10] sm:$0xff]
    %v1229 = vld [vmem:[%s4 + $0x18] sm:$0xff]
    %v1230 = vld [vmem:[%s4 + $0x20] sm:$0xff]
    %v1231 = vld [vmem:[%s4 + $0x28] sm:$0xff]
    %v1232 = vld [vmem:[%s4 + $0x30] sm:$0xff]
    %v1233 = vld [vmem:[%s4 + $0x38] sm:$0xff]
    %vm1234 = vcmask 523264
    %v1236 = vsel %vm1234, %v1224, 0
    %v1239 = vsel %vm1234, %v1225, 0
    %1241 = vmatprep.subr.mxu0 0.0
    %1242 = vmatpush1.msra.mxu0 0.0
    %1243 = vmatprep.subr.mxu0 0.0
    %1244 = vmatpush1.msra.mxu0 0.0
    %1245 = vmatprep.subr.mxu0 0.0
    %1246 = vmatpush1.msra.mxu0 0.0
    %1247 = vmatprep.subr.mxu0 0.0
    %1248 = vmatpush1.msra.mxu0 0.0
    %1249 = vmatprep.subr.mxu0 0.0
    %1250 = vmatpush1.msra.mxu0 0.0
    %1251 = vmatprep.subr.mxu0 0.0
    %1252 = vmatpush1.msra.mxu0 0.0
    %1253 = vmatprep.subr.mxu0 0.0
    %1254 = vmatpush1.msra.mxu0 0.0
    %1255 = vmatprep.subr.mxu0 0.0
    %1256 = vmatpush1.msra.mxu0 0.0
    %1257 = vmatprep.subr.mxu0 0.0
    %1258 = vmatpush1.msra.mxu0 %v1233
    %1259 = vmatprep.subr.mxu0 0.0
    %1260 = vmatpush1.msra.mxu0 %v1232
    %1261 = vmatprep.subr.mxu0 0.0
    %1262 = vmatpush1.msra.mxu0 %v1231
    %1263 = vmatprep.subr.mxu0 0.0
    %1264 = vmatpush1.msra.mxu0 %v1230
    %1265 = vmatprep.subr.mxu0 0.0
    %1266 = vmatpush1.msra.mxu0 %v1229
    %1267 = vmatprep.subr.mxu0 0.0
    %1268 = vmatpush1.msra.mxu0 %v1228
    %1269 = vmatprep.subr.mxu0 0.0
    %1270 = vmatpush1.msra.mxu0 %v1227
    %1271 = vmatprep.subr.mxu0 0.0
    %1272 = vmatpush1.msra.mxu0 %v1226
    %1273 = vmatprep.subr.mxu0 0.0
    %1274 = vmatpush2.msra.mxu0 0.0
    %1275 = vmatprep.subr.mxu0 0.0
    %1276 = vmatpush2.msra.mxu0 0.0
    %1277 = vmatprep.subr.mxu0 0.0
    %1278 = vmatpush2.msra.mxu0 0.0
    %1279 = vmatprep.subr.mxu0 0.0
    %1280 = vmatpush2.msra.mxu0 0.0
    %1281 = vmatprep.subr.mxu0 0.0
    %1282 = vmatpush2.msra.mxu0 0.0
    %1283 = vmatprep.subr.mxu0 0.0
    %1284 = vmatpush2.msra.mxu0 0.0
    %1285 = vmatprep.subr.mxu0 0.0
    %1286 = vmatpush2.msra.mxu0 0.0
    %1287 = vmatprep.subr.mxu0 0.0
    %1288 = vmatpush2.msra.mxu0 0.0
    %1289 = vmatprep.subr.mxu0 0.0
    %1290 = vmatpush2.msra.mxu0 0.0
    %1291 = vmatprep.subr.mxu0 0.0
    %1292 = vmatpush2.msra.mxu0 0.0
    %1293 = vmatprep.subr.mxu0 0.0
    %1294 = vmatpush2.msra.mxu0 0.0
    %1295 = vmatprep.subr.mxu0 0.0
    %1296 = vmatpush2.msra.mxu0 0.0
    %1297 = vmatprep.subr.mxu0 0.0
    %1298 = vmatpush2.msra.mxu0 0.0
    %1299 = vmatprep.subr.mxu0 0.0
    %1300 = vmatpush2.msra.mxu0 0.0
    %1301 = vmatprep.subr.mxu0 0.0
    %1302 = vmatpush2.msra.mxu0 0.0
    %1303 = vmatprep.subr.mxu0 0.0
    %1304 = vmatpush2.msra.mxu0 0.0
    %1305 = vmatprep.mubr.f32.mxu0 0.0
    %1306 = vmatmul.mubr.f32.gmra.mxu0 %v1236
    %v1307 = vpop.f32.mrf.mxu0
    %v1308 = vadd.f32 0.0, %v1307
    %v1309 = vpop.f32.mrf.mxu0
    %1310 = vmatprep.mubr.f32.mxu0 0.0
    %1311 = vmatmul.mubr.f32.gmra.mxu0 %v1239
    %v1312 = vpop.f32.mrf.mxu0
    %v1313 = vadd.f32 0.0, %v1312
    %v1314 = vpop.f32.mrf.mxu0
    %1315 = vdwg.mxu0
    %v1316 = vadd.f32 %v1099, %v1308
    %v1317 = vadd.f32 %v1100, %v1313
    %1318 = vst.msk [vmem:[#allocation7] sm:$0xff] %vm58, %v1316
    %1319 = vst.msk [vmem:[#allocation7 + $0x8] sm:$0xff] %vm58, %v1317
    // Predicated region
    $region34: #{jdecoder_pallas.1} parent=1 // pred_check
      _
    $region35: #{jdecoder_pallas.1} parent=1 // pred_check_branch
      %1321 = sbr.rel (0) target = $region37
    $region36: #{jdecoder_pallas.1} parent=1 // pred_region
      %s1323 = ssub.s32 256, 256
      %1324 = vsyncadd [#allocation4], %s1323
      %s1325 = sshll.u32 [#allocation7], 4
      %s1326 = int_to_ptr.vmem [resolvable:$true] %s1325
      %1331 = dma.vmem_to_hbm [thread:$0]  %s1326, 256, %s6, [#allocation4], 128, 128, 8
    $region37: #{jdecoder_pallas.1} parent=1 // pred_fallthru
      _
    // Predicated region
    $region38: #{jdecoder_pallas.1} parent=1 // pred_check
      _
    $region39: #{jdecoder_pallas.1} parent=1 // pred_check_branch
      %1333 = sbr.rel (0) target = $region41
    $region40: #{jdecoder_pallas.1} parent=1 // pred_region
      %1334 = dma.done [#allocation4], 256
    $region41: #{jdecoder_pallas.1} parent=1 // pred_fallthru
      _
    %1335 = vsyncpa [#allocation3], 1
    %1336 = vsyncpa [#allocation6], 1
    %1337 = vsyncpa [#allocation4], 1

</llo_original>
